<compile_context>
chip_gen: v7x
topology: tpu7x:2x2x1
jax: 0.10.0
libtpu: 0.0.40
codegen_flags: <defaults>
</compile_context>

<pallas_src>
import jax
import jax.numpy as jnp
from jax.experimental import pallas as pl
from jax.experimental.pallas import tpu as pltpu


def textrcnn_kernel(embed_ref, wih_ref, whh_f_ref, b_f_ref,
                    whh_b_ref, b_b_ref, fcw_ref, fcb_ref, out_ref):
    # Per batch-block shapes:
    #   embed_ref : [L, B, E]   bf16   time-major embeddings
    #   wih_ref   : [E, 8H]     bf16   columns = [W_ih_fwd | W_ih_bwd] (pre-transposed)
    #   whh_*_ref : [H, 4H]     bf16   pre-transposed
    #   b_*_ref   : [1, 4H]     f32    b_ih + b_hh
    #   fcw_ref   : [E+2H, C]   bf16   pre-transposed
    #   fcb_ref   : [1, C]      f32
    L, B, E = embed_ref.shape
    H = whh_f_ref.shape[0]
    cdt = embed_ref.dtype                      # MXU input dtype (bf16)

    wih = wih_ref[...]
    whh_f = whh_f_ref[...]
    whh_b = whh_b_ref[...]
    b_f = b_f_ref[...]
    b_b = b_b_ref[...]

    # ---- input projection, hoisted off the serial dependency chain ----
    # These dots depend only on the embeddings, so the scheduler can overlap
    # them with (and pipeline them ahead of) the recurrent h @ Whh chain.
    # TODO(synk): for large L, switch to a fori_loop over a VMEM x_proj scratch
    # instead of a full unroll.
    xg = [jnp.dot(embed_ref[t], wih, preferred_element_type=jnp.float32)
          for t in range(L)]                   # L x [B, 8H] f32

    def cell(gates, c):
        # PyTorch gate order (i, f, g, o); all element-wise math in f32.
        i = jax.nn.sigmoid(gates[:, 0:H])
        f = jax.nn.sigmoid(gates[:, H:2 * H])
        g = jnp.tanh(gates[:, 2 * H:3 * H])
        o = jax.nn.sigmoid(gates[:, 3 * H:4 * H])
        c_new = f * c + i * g
        h_new = o * jnp.tanh(c_new)
        return h_new, c_new

    zeros = jnp.zeros((B, H), jnp.float32)
    hf, cf, hb, cb = zeros, zeros, zeros, zeros
    pool_f, pool_b = zeros, zeros              # online relu+max-pool (values >= 0)

    # ---- fused fwd/bwd recurrence, fully unrolled (L small & static) ----
    # Two independent dependency chains per iteration; h/c/pool stay in vregs.
    for t in range(L):
        gf = (xg[t][:, 0:4 * H]
              + jnp.dot(hf.astype(cdt), whh_f, preferred_element_type=jnp.float32)
              + b_f)
        gb = (xg[L - 1 - t][:, 4 * H:8 * H]
              + jnp.dot(hb.astype(cdt), whh_b, preferred_element_type=jnp.float32)
              + b_b)
        hf, cf = cell(gf, cf)
        hb, cb = cell(gb, cb)
        # max_t relu(h_t): pool starts at 0, so max(pool, h) == max(pool, relu(h))
        pool_f = jnp.maximum(pool_f, hf)
        pool_b = jnp.maximum(pool_b, hb)

    # ---- relu + global max-pool over the embedding features ----
    pooled_e = jnp.max(jnp.maximum(embed_ref[...].astype(jnp.float32), 0.0),
                       axis=0)                 # [B, E] f32

    # ---- fc: cat((embed, h_fwd, h_bwd)) @ W, split along the sublane axis ----
    fcw = fcw_ref[...]
    logits = (jnp.dot(pooled_e.astype(cdt), fcw[0:E, :],
                      preferred_element_type=jnp.float32)
              + jnp.dot(pool_f.astype(cdt), fcw[E:E + H, :],
                        preferred_element_type=jnp.float32)
              + jnp.dot(pool_b.astype(cdt), fcw[E + H:E + 2 * H, :],
                        preferred_element_type=jnp.float32)
              + fcb_ref[...])
    out_ref[...] = logits


def textrcnn_forward(x_tokens, emb_table, wih_f, whh_f, b_f, wih_b, whh_b, b_b,
                     fcw, fcb, *, compute_dtype=jnp.bfloat16, b_block=None):
    """Forward pass. Takes PyTorch-layout parameters; prepares contraction-ready
    (pre-transposed, bf16) weights on the wrapper side and calls the kernel."""
    B, L = x_tokens.shape
    H = whh_f.shape[1]
    E = wih_f.shape[1]
    C = fcw.shape[0]

    # Glue: embedding gather + time-major transpose (no clean tiny-Pallas gather).
    embed = jnp.take(emb_table, x_tokens, axis=0)                  # [B, L, E]
    embed_lbe = jnp.transpose(embed, (1, 0, 2)).astype(compute_dtype)  # [L, B, E]

    # Contraction-ready weights (no transposes inside the kernel).
    wih_cat = jnp.concatenate([wih_f.T, wih_b.T], axis=1).astype(compute_dtype)  # [E, 8H]
    whh_f_t = whh_f.T.astype(compute_dtype)                        # [H, 4H]
    whh_b_t = whh_b.T.astype(compute_dtype)                        # [H, 4H]
    fcw_t = fcw.T.astype(compute_dtype)                            # [E+2H, C]
    b_f2 = b_f.reshape(1, 4 * H).astype(jnp.float32)
    b_b2 = b_b.reshape(1, 4 * H).astype(jnp.float32)
    fcb2 = fcb.reshape(1, C).astype(jnp.float32)

    bb = B if b_block is None else b_block
    nb = pl.cdiv(B, bb)

    return pl.pallas_call(
        textrcnn_kernel,
        out_shape=jax.ShapeDtypeStruct((B, C), jnp.float32),
        grid=(nb,),
        in_specs=[
            pl.BlockSpec((L, bb, E), lambda i: (0, i, 0)),         # embeddings: batch-tiled
            pl.BlockSpec((E, 8 * H), lambda i: (0, 0)),            # weights: replicated
            pl.BlockSpec((H, 4 * H), lambda i: (0, 0)),
            pl.BlockSpec((1, 4 * H), lambda i: (0, 0)),
            pl.BlockSpec((H, 4 * H), lambda i: (0, 0)),
            pl.BlockSpec((1, 4 * H), lambda i: (0, 0)),
            pl.BlockSpec((E + 2 * H, C), lambda i: (0, 0)),
            pl.BlockSpec((1, C), lambda i: (0, 0)),
        ],
        out_specs=pl.BlockSpec((bb, C), lambda i: (i, 0)),
        compiler_params=pltpu.CompilerParams(
            dimension_semantics=("parallel",)),
    )(embed_lbe, wih_cat, whh_f_t, b_f2, whh_b_t, b_b2, fcw_t, fcb2)


def jax_reference(embed_lbe, wih_cat, whh_f_t, b_f, whh_b_t, b_b, fcw_t, fcb):
    """Plain-JAX reference mirroring the PyTorch forward (same bf16/f32 policy)."""
    L, B, E = embed_lbe.shape
    H = whh_f_t.shape[0]
    cdt = embed_lbe.dtype

    def cell(gates, c):
        i = jax.nn.sigmoid(gates[:, 0:H])
        f = jax.nn.sigmoid(gates[:, H:2 * H])
        g = jnp.tanh(gates[:, 2 * H:3 * H])
        o = jax.nn.sigmoid(gates[:, 3 * H:4 * H])
        c_new = f * c + i * g
        return o * jnp.tanh(c_new), c_new

    def run_dir(whh_t, b, col0, reverse):
        h = jnp.zeros((B, H), jnp.float32)
        c = jnp.zeros((B, H), jnp.float32)
        hs = []
        ts = range(L - 1, -1, -1) if reverse else range(L)
        for t in ts:
            g = (jnp.dot(embed_lbe[t], wih_cat[:, col0:col0 + 4 * H],
                         preferred_element_type=jnp.float32)
                 + jnp.dot(h.astype(cdt), whh_t, preferred_element_type=jnp.float32)
                 + b)
            h, c = cell(g, c)
            hs.append(h)
        if reverse:
            hs = hs[::-1]
        return jnp.stack(hs)                                       # [L, B, H]

    out_f = run_dir(whh_f_t, b_f, 0, False)
    out_b = run_dir(whh_b_t, b_b, 4 * H, True)
    feats = jnp.concatenate([embed_lbe.astype(jnp.float32), out_f, out_b], axis=2)
    pooled = jnp.max(jax.nn.relu(feats), axis=0)                   # [B, E+2H]
    return jnp.dot(pooled.astype(cdt), fcw_t,
                   preferred_element_type=jnp.float32) + fcb


if __name__ == "__main__":
    # Small config consistent with the module's forward.
    VOCAB = 50
    E = 32          # embedding_size
    H = 32          # hidden_size
    L = 8           # max_seq_length
    B = 2           # batch
    C = 4           # num_classes
    # num_layers = 1 -> LSTM inter-layer dropout is a no-op.
    # TODO(synk): multi-layer LSTM + inter-layer dropout not implemented (num_layers=1 here).

    key = jax.random.PRNGKey(0)
    ks = jax.random.split(key, 12)

    emb_table = 0.1 * jax.random.normal(ks[0], (VOCAB, E), jnp.float32)
    emb_table = emb_table.at[VOCAB - 1].set(0.0)   # padding_idx = vocab_size - 1

    def lstm_params(k):
        k1, k2, k3, k4 = jax.random.split(k, 4)
        wih = 0.1 * jax.random.normal(k1, (4 * H, E), jnp.float32)   # PyTorch layout
        whh = 0.1 * jax.random.normal(k2, (4 * H, H), jnp.float32)
        bih = 0.1 * jax.random.normal(k3, (4 * H,), jnp.float32)
        bhh = 0.1 * jax.random.normal(k4, (4 * H,), jnp.float32)
        return wih, whh, bih + bhh

    wih_f, whh_f, b_f = lstm_params(ks[1])
    wih_b, whh_b, b_b = lstm_params(ks[2])

    fcw = 0.1 * jax.random.normal(ks[3], (C, E + 2 * H), jnp.float32)  # PyTorch layout
    fcb = 0.1 * jax.random.normal(ks[4], (C,), jnp.float32)

    x = jax.random.randint(ks[5], (B, L), 0, VOCAB - 1, dtype=jnp.int32)

    logits = textrcnn_forward(x, emb_table, wih_f, whh_f, b_f,
                              wih_b, whh_b, b_b, fcw, fcb)
    jax.block_until_ready(logits)
    assert logits.shape == (B, C)

    # Correctness check against a plain-JAX reference (same bf16/f32 policy).
    cdt = jnp.bfloat16
    embed_lbe = jnp.transpose(jnp.take(emb_table, x, axis=0), (1, 0, 2)).astype(cdt)
    wih_cat = jnp.concatenate([wih_f.T, wih_b.T], axis=1).astype(cdt)
    ref = jax_reference(embed_lbe, wih_cat,
                        whh_f.T.astype(cdt), b_f.reshape(1, 4 * H),
                        whh_b.T.astype(cdt), b_b.reshape(1, 4 * H),
                        fcw.T.astype(cdt), fcb.reshape(1, C))
    err = float(jnp.max(jnp.abs(logits - ref)))
    assert err < 2e-2, f"max abs error {err}"

    print("KERNEL_OK")
</pallas_src>

<mosaic_0001>
module attributes {stable_mosaic.version = 11 : i64} {
  func.func @textrcnn_kernel(%arg0: i32, %arg1: memref<8x2x32xbf16, #tpu.memory_space<vmem>>, %arg2: memref<32x256xbf16, #tpu.memory_space<vmem>>, %arg3: memref<32x128xbf16, #tpu.memory_space<vmem>>, %arg4: memref<1x128xf32, #tpu.memory_space<vmem>>, %arg5: memref<32x128xbf16, #tpu.memory_space<vmem>>, %arg6: memref<1x128xf32, #tpu.memory_space<vmem>>, %arg7: memref<96x4xbf16, #tpu.memory_space<vmem>>, %arg8: memref<1x4xf32, #tpu.memory_space<vmem>>, %arg9: memref<2x4xf32, #tpu.memory_space<vmem>>) attributes {dimension_semantics = [#tpu.dimension_semantics<parallel>], iteration_bounds = array<i64: 1>, scalar_prefetch = 0 : i64, scratch_operands = 0 : i64, tpu.core_type = #tpu.core_type<tc>, window_params = [{transform_indices = @transform_0, window_bounds = array<i64: 8, 2, 32>}, {pipeline_mode = #tpu.pipeline_mode<synchronous>, transform_indices = @transform_1, window_bounds = array<i64: 32, 256>}, {pipeline_mode = #tpu.pipeline_mode<synchronous>, transform_indices = @transform_2, window_bounds = array<i64: 32, 128>}, {pipeline_mode = #tpu.pipeline_mode<synchronous>, transform_indices = @transform_3, window_bounds = array<i64: 1, 128>}, {pipeline_mode = #tpu.pipeline_mode<synchronous>, transform_indices = @transform_4, window_bounds = array<i64: 32, 128>}, {pipeline_mode = #tpu.pipeline_mode<synchronous>, transform_indices = @transform_5, window_bounds = array<i64: 1, 128>}, {pipeline_mode = #tpu.pipeline_mode<synchronous>, transform_indices = @transform_6, window_bounds = array<i64: 96, 4>}, {pipeline_mode = #tpu.pipeline_mode<synchronous>, transform_indices = @transform_7, window_bounds = array<i64: 1, 4>}, {transform_indices = @transform_8, window_bounds = array<i64: 2, 4>}]} {
    %c0 = arith.constant 0 : index
    %c0_0 = arith.constant 0 : index
    %0 = vector.load %arg2[%c0, %c0_0] : memref<32x256xbf16, #tpu.memory_space<vmem>>, vector<32x256xbf16>
    %c0_1 = arith.constant 0 : index
    %c0_2 = arith.constant 0 : index
    %1 = vector.load %arg3[%c0_1, %c0_2] : memref<32x128xbf16, #tpu.memory_space<vmem>>, vector<32x128xbf16>
    %c0_3 = arith.constant 0 : index
    %c0_4 = arith.constant 0 : index
    %2 = vector.load %arg5[%c0_3, %c0_4] : memref<32x128xbf16, #tpu.memory_space<vmem>>, vector<32x128xbf16>
    %c0_5 = arith.constant 0 : index
    %c0_6 = arith.constant 0 : index
    %3 = vector.load %arg4[%c0_5, %c0_6] : memref<1x128xf32, #tpu.memory_space<vmem>>, vector<1x128xf32>
    %c0_7 = arith.constant 0 : index
    %c0_8 = arith.constant 0 : index
    %4 = vector.load %arg6[%c0_7, %c0_8] : memref<1x128xf32, #tpu.memory_space<vmem>>, vector<1x128xf32>
    %c0_9 = arith.constant 0 : index
    %c0_10 = arith.constant 0 : index
    %c0_11 = arith.constant 0 : index
    %5 = vector.load %arg1[%c0_9, %c0_10, %c0_11] : memref<8x2x32xbf16, #tpu.memory_space<vmem>>, vector<1x2x32xbf16>
    %6 = vector.shape_cast %5 : vector<1x2x32xbf16> to vector<2x32xbf16>
    %cst = arith.constant dense<0.000000e+00> : vector<2x256xf32>
    %7 = tpu.matmul %6, %0, %cst {dimension_numbers = #tpu.dot_dimension_numbers<[1], [0], [0], [1], [0, 0, 1, 1], [], []>} : vector<2x32xbf16>, vector<32x256xbf16>, vector<2x256xf32> -> vector<2x256xf32>
    %c1 = arith.constant 1 : index
    %c0_12 = arith.constant 0 : index
    %c0_13 = arith.constant 0 : index
    %8 = vector.load %arg1[%c1, %c0_12, %c0_13] : memref<8x2x32xbf16, #tpu.memory_space<vmem>>, vector<1x2x32xbf16>
    %9 = vector.shape_cast %8 : vector<1x2x32xbf16> to vector<2x32xbf16>
    %cst_14 = arith.constant dense<0.000000e+00> : vector<2x256xf32>
    %10 = tpu.matmul %9, %0, %cst_14 {dimension_numbers = #tpu.dot_dimension_numbers<[1], [0], [0], [1], [0, 0, 1, 1], [], []>} : vector<2x32xbf16>, vector<32x256xbf16>, vector<2x256xf32> -> vector<2x256xf32>
    %c2 = arith.constant 2 : index
    %c0_15 = arith.constant 0 : index
    %c0_16 = arith.constant 0 : index
    %11 = vector.load %arg1[%c2, %c0_15, %c0_16] : memref<8x2x32xbf16, #tpu.memory_space<vmem>>, vector<1x2x32xbf16>
    %12 = vector.shape_cast %11 : vector<1x2x32xbf16> to vector<2x32xbf16>
    %cst_17 = arith.constant dense<0.000000e+00> : vector<2x256xf32>
    %13 = tpu.matmul %12, %0, %cst_17 {dimension_numbers = #tpu.dot_dimension_numbers<[1], [0], [0], [1], [0, 0, 1, 1], [], []>} : vector<2x32xbf16>, vector<32x256xbf16>, vector<2x256xf32> -> vector<2x256xf32>
    %c3 = arith.constant 3 : index
    %c0_18 = arith.constant 0 : index
    %c0_19 = arith.constant 0 : index
    %14 = vector.load %arg1[%c3, %c0_18, %c0_19] : memref<8x2x32xbf16, #tpu.memory_space<vmem>>, vector<1x2x32xbf16>
    %15 = vector.shape_cast %14 : vector<1x2x32xbf16> to vector<2x32xbf16>
    %cst_20 = arith.constant dense<0.000000e+00> : vector<2x256xf32>
    %16 = tpu.matmul %15, %0, %cst_20 {dimension_numbers = #tpu.dot_dimension_numbers<[1], [0], [0], [1], [0, 0, 1, 1], [], []>} : vector<2x32xbf16>, vector<32x256xbf16>, vector<2x256xf32> -> vector<2x256xf32>
    %c4 = arith.constant 4 : index
    %c0_21 = arith.constant 0 : index
    %c0_22 = arith.constant 0 : index
    %17 = vector.load %arg1[%c4, %c0_21, %c0_22] : memref<8x2x32xbf16, #tpu.memory_space<vmem>>, vector<1x2x32xbf16>
    %18 = vector.shape_cast %17 : vector<1x2x32xbf16> to vector<2x32xbf16>
    %cst_23 = arith.constant dense<0.000000e+00> : vector<2x256xf32>
    %19 = tpu.matmul %18, %0, %cst_23 {dimension_numbers = #tpu.dot_dimension_numbers<[1], [0], [0], [1], [0, 0, 1, 1], [], []>} : vector<2x32xbf16>, vector<32x256xbf16>, vector<2x256xf32> -> vector<2x256xf32>
    %c5 = arith.constant 5 : index
    %c0_24 = arith.constant 0 : index
    %c0_25 = arith.constant 0 : index
    %20 = vector.load %arg1[%c5, %c0_24, %c0_25] : memref<8x2x32xbf16, #tpu.memory_space<vmem>>, vector<1x2x32xbf16>
    %21 = vector.shape_cast %20 : vector<1x2x32xbf16> to vector<2x32xbf16>
    %cst_26 = arith.constant dense<0.000000e+00> : vector<2x256xf32>
    %22 = tpu.matmul %21, %0, %cst_26 {dimension_numbers = #tpu.dot_dimension_numbers<[1], [0], [0], [1], [0, 0, 1, 1], [], []>} : vector<2x32xbf16>, vector<32x256xbf16>, vector<2x256xf32> -> vector<2x256xf32>
    %c6 = arith.constant 6 : index
    %c0_27 = arith.constant 0 : index
    %c0_28 = arith.constant 0 : index
    %23 = vector.load %arg1[%c6, %c0_27, %c0_28] : memref<8x2x32xbf16, #tpu.memory_space<vmem>>, vector<1x2x32xbf16>
    %24 = vector.shape_cast %23 : vector<1x2x32xbf16> to vector<2x32xbf16>
    %cst_29 = arith.constant dense<0.000000e+00> : vector<2x256xf32>
    %25 = tpu.matmul %24, %0, %cst_29 {dimension_numbers = #tpu.dot_dimension_numbers<[1], [0], [0], [1], [0, 0, 1, 1], [], []>} : vector<2x32xbf16>, vector<32x256xbf16>, vector<2x256xf32> -> vector<2x256xf32>
    %c7 = arith.constant 7 : index
    %c0_30 = arith.constant 0 : index
    %c0_31 = arith.constant 0 : index
    %26 = vector.load %arg1[%c7, %c0_30, %c0_31] : memref<8x2x32xbf16, #tpu.memory_space<vmem>>, vector<1x2x32xbf16>
    %27 = vector.shape_cast %26 : vector<1x2x32xbf16> to vector<2x32xbf16>
    %cst_32 = arith.constant dense<0.000000e+00> : vector<2x256xf32>
    %28 = tpu.matmul %27, %0, %cst_32 {dimension_numbers = #tpu.dot_dimension_numbers<[1], [0], [0], [1], [0, 0, 1, 1], [], []>} : vector<2x32xbf16>, vector<32x256xbf16>, vector<2x256xf32> -> vector<2x256xf32>
    %cst_33 = arith.constant 0.000000e+00 : f32
    %29 = vector.broadcast %cst_33 : f32 to vector<2x32xf32>
    %30 = vector.extract_strided_slice %7 {offsets = [0, 0], sizes = [2, 128], strides = [1, 1]} : vector<2x256xf32> to vector<2x128xf32>
    %31 = arith.truncf %29 : vector<2x32xf32> to vector<2x32xbf16>
    %cst_34 = arith.constant dense<0.000000e+00> : vector<2x128xf32>
    %32 = tpu.matmul %31, %1, %cst_34 {dimension_numbers = #tpu.dot_dimension_numbers<[1], [0], [0], [1], [0, 0, 1, 1], [], []>} : vector<2x32xbf16>, vector<32x128xbf16>, vector<2x128xf32> -> vector<2x128xf32>
    %33 = arith.addf %30, %32 : vector<2x128xf32>
    %34 = vector.broadcast %3 : vector<1x128xf32> to vector<2x128xf32>
    %35 = arith.addf %33, %34 : vector<2x128xf32>
    %36 = vector.extract_strided_slice %28 {offsets = [0, 128], sizes = [2, 128], strides = [1, 1]} : vector<2x256xf32> to vector<2x128xf32>
    %37 = arith.truncf %29 : vector<2x32xf32> to vector<2x32xbf16>
    %cst_35 = arith.constant dense<0.000000e+00> : vector<2x128xf32>
    %38 = tpu.matmul %37, %2, %cst_35 {dimension_numbers = #tpu.dot_dimension_numbers<[1], [0], [0], [1], [0, 0, 1, 1], [], []>} : vector<2x32xbf16>, vector<32x128xbf16>, vector<2x128xf32> -> vector<2x128xf32>
    %39 = arith.addf %36, %38 : vector<2x128xf32>
    %40 = vector.broadcast %4 : vector<1x128xf32> to vector<2x128xf32>
    %41 = arith.addf %39, %40 : vector<2x128xf32>
    %42 = vector.extract_strided_slice %35 {offsets = [0, 0], sizes = [2, 32], strides = [1, 1]} : vector<2x128xf32> to vector<2x32xf32>
    %43 = arith.negf %42 : vector<2x32xf32>
    %44 = math.exp %43 : vector<2x32xf32>
    %cst_36 = arith.constant 1.000000e+00 : f32
    %45 = vector.broadcast %cst_36 : f32 to vector<2x32xf32>
    %46 = arith.addf %45, %44 : vector<2x32xf32>
    %47 = arith.divf %45, %46 : vector<2x32xf32>
    %48 = vector.extract_strided_slice %35 {offsets = [0, 32], sizes = [2, 32], strides = [1, 1]} : vector<2x128xf32> to vector<2x32xf32>
    %49 = arith.negf %48 : vector<2x32xf32>
    %50 = math.exp %49 : vector<2x32xf32>
    %cst_37 = arith.constant 1.000000e+00 : f32
    %51 = vector.broadcast %cst_37 : f32 to vector<2x32xf32>
    %52 = arith.addf %51, %50 : vector<2x32xf32>
    %53 = arith.divf %51, %52 : vector<2x32xf32>
    %54 = vector.extract_strided_slice %35 {offsets = [0, 64], sizes = [2, 32], strides = [1, 1]} : vector<2x128xf32> to vector<2x32xf32>
    %55 = math.tanh %54 : vector<2x32xf32>
    %56 = vector.extract_strided_slice %35 {offsets = [0, 96], sizes = [2, 32], strides = [1, 1]} : vector<2x128xf32> to vector<2x32xf32>
    %57 = arith.negf %56 : vector<2x32xf32>
    %58 = math.exp %57 : vector<2x32xf32>
    %cst_38 = arith.constant 1.000000e+00 : f32
    %59 = vector.broadcast %cst_38 : f32 to vector<2x32xf32>
    %60 = arith.addf %59, %58 : vector<2x32xf32>
    %61 = arith.divf %59, %60 : vector<2x32xf32>
    %62 = arith.mulf %53, %29 : vector<2x32xf32>
    %63 = arith.mulf %47, %55 : vector<2x32xf32>
    %64 = arith.addf %62, %63 : vector<2x32xf32>
    %65 = math.tanh %64 : vector<2x32xf32>
    %66 = arith.mulf %61, %65 : vector<2x32xf32>
    %67 = vector.extract_strided_slice %41 {offsets = [0, 0], sizes = [2, 32], strides = [1, 1]} : vector<2x128xf32> to vector<2x32xf32>
    %68 = arith.negf %67 : vector<2x32xf32>
    %69 = math.exp %68 : vector<2x32xf32>
    %cst_39 = arith.constant 1.000000e+00 : f32
    %70 = vector.broadcast %cst_39 : f32 to vector<2x32xf32>
    %71 = arith.addf %70, %69 : vector<2x32xf32>
    %72 = arith.divf %70, %71 : vector<2x32xf32>
    %73 = vector.extract_strided_slice %41 {offsets = [0, 32], sizes = [2, 32], strides = [1, 1]} : vector<2x128xf32> to vector<2x32xf32>
    %74 = arith.negf %73 : vector<2x32xf32>
    %75 = math.exp %74 : vector<2x32xf32>
    %cst_40 = arith.constant 1.000000e+00 : f32
    %76 = vector.broadcast %cst_40 : f32 to vector<2x32xf32>
    %77 = arith.addf %76, %75 : vector<2x32xf32>
    %78 = arith.divf %76, %77 : vector<2x32xf32>
    %79 = vector.extract_strided_slice %41 {offsets = [0, 64], sizes = [2, 32], strides = [1, 1]} : vector<2x128xf32> to vector<2x32xf32>
    %80 = math.tanh %79 : vector<2x32xf32>
    %81 = vector.extract_strided_slice %41 {offsets = [0, 96], sizes = [2, 32], strides = [1, 1]} : vector<2x128xf32> to vector<2x32xf32>
    %82 = arith.negf %81 : vector<2x32xf32>
    %83 = math.exp %82 : vector<2x32xf32>
    %cst_41 = arith.constant 1.000000e+00 : f32
    %84 = vector.broadcast %cst_41 : f32 to vector<2x32xf32>
    %85 = arith.addf %84, %83 : vector<2x32xf32>
    %86 = arith.divf %84, %85 : vector<2x32xf32>
    %87 = arith.mulf %78, %29 : vector<2x32xf32>
    %88 = arith.mulf %72, %80 : vector<2x32xf32>
    %89 = arith.addf %87, %88 : vector<2x32xf32>
    %90 = math.tanh %89 : vector<2x32xf32>
    %91 = arith.mulf %86, %90 : vector<2x32xf32>
    %92 = arith.maximumf %29, %66 : vector<2x32xf32>
    %93 = arith.maximumf %29, %91 : vector<2x32xf32>
    %94 = vector.extract_strided_slice %10 {offsets = [0, 0], sizes = [2, 128], strides = [1, 1]} : vector<2x256xf32> to vector<2x128xf32>
    %95 = arith.truncf %66 : vector<2x32xf32> to vector<2x32xbf16>
    %cst_42 = arith.constant dense<0.000000e+00> : vector<2x128xf32>
    %96 = tpu.matmul %95, %1, %cst_42 {dimension_numbers = #tpu.dot_dimension_numbers<[1], [0], [0], [1], [0, 0, 1, 1], [], []>} : vector<2x32xbf16>, vector<32x128xbf16>, vector<2x128xf32> -> vector<2x128xf32>
    %97 = arith.addf %94, %96 : vector<2x128xf32>
    %98 = vector.broadcast %3 : vector<1x128xf32> to vector<2x128xf32>
    %99 = arith.addf %97, %98 : vector<2x128xf32>
    %100 = vector.extract_strided_slice %25 {offsets = [0, 128], sizes = [2, 128], strides = [1, 1]} : vector<2x256xf32> to vector<2x128xf32>
    %101 = arith.truncf %91 : vector<2x32xf32> to vector<2x32xbf16>
    %cst_43 = arith.constant dense<0.000000e+00> : vector<2x128xf32>
    %102 = tpu.matmul %101, %2, %cst_43 {dimension_numbers = #tpu.dot_dimension_numbers<[1], [0], [0], [1], [0, 0, 1, 1], [], []>} : vector<2x32xbf16>, vector<32x128xbf16>, vector<2x128xf32> -> vector<2x128xf32>
    %103 = arith.addf %100, %102 : vector<2x128xf32>
    %104 = vector.broadcast %4 : vector<1x128xf32> to vector<2x128xf32>
    %105 = arith.addf %103, %104 : vector<2x128xf32>
    %106 = vector.extract_strided_slice %99 {offsets = [0, 0], sizes = [2, 32], strides = [1, 1]} : vector<2x128xf32> to vector<2x32xf32>
    %107 = arith.negf %106 : vector<2x32xf32>
    %108 = math.exp %107 : vector<2x32xf32>
    %cst_44 = arith.constant 1.000000e+00 : f32
    %109 = vector.broadcast %cst_44 : f32 to vector<2x32xf32>
    %110 = arith.addf %109, %108 : vector<2x32xf32>
    %111 = arith.divf %109, %110 : vector<2x32xf32>
    %112 = vector.extract_strided_slice %99 {offsets = [0, 32], sizes = [2, 32], strides = [1, 1]} : vector<2x128xf32> to vector<2x32xf32>
    %113 = arith.negf %112 : vector<2x32xf32>
    %114 = math.exp %113 : vector<2x32xf32>
    %cst_45 = arith.constant 1.000000e+00 : f32
    %115 = vector.broadcast %cst_45 : f32 to vector<2x32xf32>
    %116 = arith.addf %115, %114 : vector<2x32xf32>
    %117 = arith.divf %115, %116 : vector<2x32xf32>
    %118 = vector.extract_strided_slice %99 {offsets = [0, 64], sizes = [2, 32], strides = [1, 1]} : vector<2x128xf32> to vector<2x32xf32>
    %119 = math.tanh %118 : vector<2x32xf32>
    %120 = vector.extract_strided_slice %99 {offsets = [0, 96], sizes = [2, 32], strides = [1, 1]} : vector<2x128xf32> to vector<2x32xf32>
    %121 = arith.negf %120 : vector<2x32xf32>
    %122 = math.exp %121 : vector<2x32xf32>
    %cst_46 = arith.constant 1.000000e+00 : f32
    %123 = vector.broadcast %cst_46 : f32 to vector<2x32xf32>
    %124 = arith.addf %123, %122 : vector<2x32xf32>
    %125 = arith.divf %123, %124 : vector<2x32xf32>
    %126 = arith.mulf %117, %64 : vector<2x32xf32>
    %127 = arith.mulf %111, %119 : vector<2x32xf32>
    %128 = arith.addf %126, %127 : vector<2x32xf32>
    %129 = math.tanh %128 : vector<2x32xf32>
    %130 = arith.mulf %125, %129 : vector<2x32xf32>
    %131 = vector.extract_strided_slice %105 {offsets = [0, 0], sizes = [2, 32], strides = [1, 1]} : vector<2x128xf32> to vector<2x32xf32>
    %132 = arith.negf %131 : vector<2x32xf32>
    %133 = math.exp %132 : vector<2x32xf32>
    %cst_47 = arith.constant 1.000000e+00 : f32
    %134 = vector.broadcast %cst_47 : f32 to vector<2x32xf32>
    %135 = arith.addf %134, %133 : vector<2x32xf32>
    %136 = arith.divf %134, %135 : vector<2x32xf32>
    %137 = vector.extract_strided_slice %105 {offsets = [0, 32], sizes = [2, 32], strides = [1, 1]} : vector<2x128xf32> to vector<2x32xf32>
    %138 = arith.negf %137 : vector<2x32xf32>
    %139 = math.exp %138 : vector<2x32xf32>
    %cst_48 = arith.constant 1.000000e+00 : f32
    %140 = vector.broadcast %cst_48 : f32 to vector<2x32xf32>
    %141 = arith.addf %140, %139 : vector<2x32xf32>
    %142 = arith.divf %140, %141 : vector<2x32xf32>
    %143 = vector.extract_strided_slice %105 {offsets = [0, 64], sizes = [2, 32], strides = [1, 1]} : vector<2x128xf32> to vector<2x32xf32>
    %144 = math.tanh %143 : vector<2x32xf32>
    %145 = vector.extract_strided_slice %105 {offsets = [0, 96], sizes = [2, 32], strides = [1, 1]} : vector<2x128xf32> to vector<2x32xf32>
    %146 = arith.negf %145 : vector<2x32xf32>
    %147 = math.exp %146 : vector<2x32xf32>
    %cst_49 = arith.constant 1.000000e+00 : f32
    %148 = vector.broadcast %cst_49 : f32 to vector<2x32xf32>
    %149 = arith.addf %148, %147 : vector<2x32xf32>
    %150 = arith.divf %148, %149 : vector<2x32xf32>
    %151 = arith.mulf %142, %89 : vector<2x32xf32>
    %152 = arith.mulf %136, %144 : vector<2x32xf32>
    %153 = arith.addf %151, %152 : vector<2x32xf32>
    %154 = math.tanh %153 : vector<2x32xf32>
    %155 = arith.mulf %150, %154 : vector<2x32xf32>
    %156 = arith.maximumf %92, %130 : vector<2x32xf32>
    %157 = arith.maximumf %93, %155 : vector<2x32xf32>
    %158 = vector.extract_strided_slice %13 {offsets = [0, 0], sizes = [2, 128], strides = [1, 1]} : vector<2x256xf32> to vector<2x128xf32>
    %159 = arith.truncf %130 : vector<2x32xf32> to vector<2x32xbf16>
    %cst_50 = arith.constant dense<0.000000e+00> : vector<2x128xf32>
    %160 = tpu.matmul %159, %1, %cst_50 {dimension_numbers = #tpu.dot_dimension_numbers<[1], [0], [0], [1], [0, 0, 1, 1], [], []>} : vector<2x32xbf16>, vector<32x128xbf16>, vector<2x128xf32> -> vector<2x128xf32>
    %161 = arith.addf %158, %160 : vector<2x128xf32>
    %162 = vector.broadcast %3 : vector<1x128xf32> to vector<2x128xf32>
    %163 = arith.addf %161, %162 : vector<2x128xf32>
    %164 = vector.extract_strided_slice %22 {offsets = [0, 128], sizes = [2, 128], strides = [1, 1]} : vector<2x256xf32> to vector<2x128xf32>
    %165 = arith.truncf %155 : vector<2x32xf32> to vector<2x32xbf16>
    %cst_51 = arith.constant dense<0.000000e+00> : vector<2x128xf32>
    %166 = tpu.matmul %165, %2, %cst_51 {dimension_numbers = #tpu.dot_dimension_numbers<[1], [0], [0], [1], [0, 0, 1, 1], [], []>} : vector<2x32xbf16>, vector<32x128xbf16>, vector<2x128xf32> -> vector<2x128xf32>
    %167 = arith.addf %164, %166 : vector<2x128xf32>
    %168 = vector.broadcast %4 : vector<1x128xf32> to vector<2x128xf32>
    %169 = arith.addf %167, %168 : vector<2x128xf32>
    %170 = vector.extract_strided_slice %163 {offsets = [0, 0], sizes = [2, 32], strides = [1, 1]} : vector<2x128xf32> to vector<2x32xf32>
    %171 = arith.negf %170 : vector<2x32xf32>
    %172 = math.exp %171 : vector<2x32xf32>
    %cst_52 = arith.constant 1.000000e+00 : f32
    %173 = vector.broadcast %cst_52 : f32 to vector<2x32xf32>
    %174 = arith.addf %173, %172 : vector<2x32xf32>
    %175 = arith.divf %173, %174 : vector<2x32xf32>
    %176 = vector.extract_strided_slice %163 {offsets = [0, 32], sizes = [2, 32], strides = [1, 1]} : vector<2x128xf32> to vector<2x32xf32>
    %177 = arith.negf %176 : vector<2x32xf32>
    %178 = math.exp %177 : vector<2x32xf32>
    %cst_53 = arith.constant 1.000000e+00 : f32
    %179 = vector.broadcast %cst_53 : f32 to vector<2x32xf32>
    %180 = arith.addf %179, %178 : vector<2x32xf32>
    %181 = arith.divf %179, %180 : vector<2x32xf32>
    %182 = vector.extract_strided_slice %163 {offsets = [0, 64], sizes = [2, 32], strides = [1, 1]} : vector<2x128xf32> to vector<2x32xf32>
    %183 = math.tanh %182 : vector<2x32xf32>
    %184 = vector.extract_strided_slice %163 {offsets = [0, 96], sizes = [2, 32], strides = [1, 1]} : vector<2x128xf32> to vector<2x32xf32>
    %185 = arith.negf %184 : vector<2x32xf32>
    %186 = math.exp %185 : vector<2x32xf32>
    %cst_54 = arith.constant 1.000000e+00 : f32
    %187 = vector.broadcast %cst_54 : f32 to vector<2x32xf32>
    %188 = arith.addf %187, %186 : vector<2x32xf32>
    %189 = arith.divf %187, %188 : vector<2x32xf32>
    %190 = arith.mulf %181, %128 : vector<2x32xf32>
    %191 = arith.mulf %175, %183 : vector<2x32xf32>
    %192 = arith.addf %190, %191 : vector<2x32xf32>
    %193 = math.tanh %192 : vector<2x32xf32>
    %194 = arith.mulf %189, %193 : vector<2x32xf32>
    %195 = vector.extract_strided_slice %169 {offsets = [0, 0], sizes = [2, 32], strides = [1, 1]} : vector<2x128xf32> to vector<2x32xf32>
    %196 = arith.negf %195 : vector<2x32xf32>
    %197 = math.exp %196 : vector<2x32xf32>
    %cst_55 = arith.constant 1.000000e+00 : f32
    %198 = vector.broadcast %cst_55 : f32 to vector<2x32xf32>
    %199 = arith.addf %198, %197 : vector<2x32xf32>
    %200 = arith.divf %198, %199 : vector<2x32xf32>
    %201 = vector.extract_strided_slice %169 {offsets = [0, 32], sizes = [2, 32], strides = [1, 1]} : vector<2x128xf32> to vector<2x32xf32>
    %202 = arith.negf %201 : vector<2x32xf32>
    %203 = math.exp %202 : vector<2x32xf32>
    %cst_56 = arith.constant 1.000000e+00 : f32
    %204 = vector.broadcast %cst_56 : f32 to vector<2x32xf32>
    %205 = arith.addf %204, %203 : vector<2x32xf32>
    %206 = arith.divf %204, %205 : vector<2x32xf32>
    %207 = vector.extract_strided_slice %169 {offsets = [0, 64], sizes = [2, 32], strides = [1, 1]} : vector<2x128xf32> to vector<2x32xf32>
    %208 = math.tanh %207 : vector<2x32xf32>
    %209 = vector.extract_strided_slice %169 {offsets = [0, 96], sizes = [2, 32], strides = [1, 1]} : vector<2x128xf32> to vector<2x32xf32>
    %210 = arith.negf %209 : vector<2x32xf32>
    %211 = math.exp %210 : vector<2x32xf32>
    %cst_57 = arith.constant 1.000000e+00 : f32
    %212 = vector.broadcast %cst_57 : f32 to vector<2x32xf32>
    %213 = arith.addf %212, %211 : vector<2x32xf32>
    %214 = arith.divf %212, %213 : vector<2x32xf32>
    %215 = arith.mulf %206, %153 : vector<2x32xf32>
    %216 = arith.mulf %200, %208 : vector<2x32xf32>
    %217 = arith.addf %215, %216 : vector<2x32xf32>
    %218 = math.tanh %217 : vector<2x32xf32>
    %219 = arith.mulf %214, %218 : vector<2x32xf32>
    %220 = arith.maximumf %156, %194 : vector<2x32xf32>
    %221 = arith.maximumf %157, %219 : vector<2x32xf32>
    %222 = vector.extract_strided_slice %16 {offsets = [0, 0], sizes = [2, 128], strides = [1, 1]} : vector<2x256xf32> to vector<2x128xf32>
    %223 = arith.truncf %194 : vector<2x32xf32> to vector<2x32xbf16>
    %cst_58 = arith.constant dense<0.000000e+00> : vector<2x128xf32>
    %224 = tpu.matmul %223, %1, %cst_58 {dimension_numbers = #tpu.dot_dimension_numbers<[1], [0], [0], [1], [0, 0, 1, 1], [], []>} : vector<2x32xbf16>, vector<32x128xbf16>, vector<2x128xf32> -> vector<2x128xf32>
    %225 = arith.addf %222, %224 : vector<2x128xf32>
    %226 = vector.broadcast %3 : vector<1x128xf32> to vector<2x128xf32>
    %227 = arith.addf %225, %226 : vector<2x128xf32>
    %228 = vector.extract_strided_slice %19 {offsets = [0, 128], sizes = [2, 128], strides = [1, 1]} : vector<2x256xf32> to vector<2x128xf32>
    %229 = arith.truncf %219 : vector<2x32xf32> to vector<2x32xbf16>
    %cst_59 = arith.constant dense<0.000000e+00> : vector<2x128xf32>
    %230 = tpu.matmul %229, %2, %cst_59 {dimension_numbers = #tpu.dot_dimension_numbers<[1], [0], [0], [1], [0, 0, 1, 1], [], []>} : vector<2x32xbf16>, vector<32x128xbf16>, vector<2x128xf32> -> vector<2x128xf32>
    %231 = arith.addf %228, %230 : vector<2x128xf32>
    %232 = vector.broadcast %4 : vector<1x128xf32> to vector<2x128xf32>
    %233 = arith.addf %231, %232 : vector<2x128xf32>
    %234 = vector.extract_strided_slice %227 {offsets = [0, 0], sizes = [2, 32], strides = [1, 1]} : vector<2x128xf32> to vector<2x32xf32>
    %235 = arith.negf %234 : vector<2x32xf32>
    %236 = math.exp %235 : vector<2x32xf32>
    %cst_60 = arith.constant 1.000000e+00 : f32
    %237 = vector.broadcast %cst_60 : f32 to vector<2x32xf32>
    %238 = arith.addf %237, %236 : vector<2x32xf32>
    %239 = arith.divf %237, %238 : vector<2x32xf32>
    %240 = vector.extract_strided_slice %227 {offsets = [0, 32], sizes = [2, 32], strides = [1, 1]} : vector<2x128xf32> to vector<2x32xf32>
    %241 = arith.negf %240 : vector<2x32xf32>
    %242 = math.exp %241 : vector<2x32xf32>
    %cst_61 = arith.constant 1.000000e+00 : f32
    %243 = vector.broadcast %cst_61 : f32 to vector<2x32xf32>
    %244 = arith.addf %243, %242 : vector<2x32xf32>
    %245 = arith.divf %243, %244 : vector<2x32xf32>
    %246 = vector.extract_strided_slice %227 {offsets = [0, 64], sizes = [2, 32], strides = [1, 1]} : vector<2x128xf32> to vector<2x32xf32>
    %247 = math.tanh %246 : vector<2x32xf32>
    %248 = vector.extract_strided_slice %227 {offsets = [0, 96], sizes = [2, 32], strides = [1, 1]} : vector<2x128xf32> to vector<2x32xf32>
    %249 = arith.negf %248 : vector<2x32xf32>
    %250 = math.exp %249 : vector<2x32xf32>
    %cst_62 = arith.constant 1.000000e+00 : f32
    %251 = vector.broadcast %cst_62 : f32 to vector<2x32xf32>
    %252 = arith.addf %251, %250 : vector<2x32xf32>
    %253 = arith.divf %251, %252 : vector<2x32xf32>
    %254 = arith.mulf %245, %192 : vector<2x32xf32>
    %255 = arith.mulf %239, %247 : vector<2x32xf32>
    %256 = arith.addf %254, %255 : vector<2x32xf32>
    %257 = math.tanh %256 : vector<2x32xf32>
    %258 = arith.mulf %253, %257 : vector<2x32xf32>
    %259 = vector.extract_strided_slice %233 {offsets = [0, 0], sizes = [2, 32], strides = [1, 1]} : vector<2x128xf32> to vector<2x32xf32>
    %260 = arith.negf %259 : vector<2x32xf32>
    %261 = math.exp %260 : vector<2x32xf32>
    %cst_63 = arith.constant 1.000000e+00 : f32
    %262 = vector.broadcast %cst_63 : f32 to vector<2x32xf32>
    %263 = arith.addf %262, %261 : vector<2x32xf32>
    %264 = arith.divf %262, %263 : vector<2x32xf32>
    %265 = vector.extract_strided_slice %233 {offsets = [0, 32], sizes = [2, 32], strides = [1, 1]} : vector<2x128xf32> to vector<2x32xf32>
    %266 = arith.negf %265 : vector<2x32xf32>
    %267 = math.exp %266 : vector<2x32xf32>
    %cst_64 = arith.constant 1.000000e+00 : f32
    %268 = vector.broadcast %cst_64 : f32 to vector<2x32xf32>
    %269 = arith.addf %268, %267 : vector<2x32xf32>
    %270 = arith.divf %268, %269 : vector<2x32xf32>
    %271 = vector.extract_strided_slice %233 {offsets = [0, 64], sizes = [2, 32], strides = [1, 1]} : vector<2x128xf32> to vector<2x32xf32>
    %272 = math.tanh %271 : vector<2x32xf32>
    %273 = vector.extract_strided_slice %233 {offsets = [0, 96], sizes = [2, 32], strides = [1, 1]} : vector<2x128xf32> to vector<2x32xf32>
    %274 = arith.negf %273 : vector<2x32xf32>
    %275 = math.exp %274 : vector<2x32xf32>
    %cst_65 = arith.constant 1.000000e+00 : f32
    %276 = vector.broadcast %cst_65 : f32 to vector<2x32xf32>
    %277 = arith.addf %276, %275 : vector<2x32xf32>
    %278 = arith.divf %276, %277 : vector<2x32xf32>
    %279 = arith.mulf %270, %217 : vector<2x32xf32>
    %280 = arith.mulf %264, %272 : vector<2x32xf32>
    %281 = arith.addf %279, %280 : vector<2x32xf32>
    %282 = math.tanh %281 : vector<2x32xf32>
    %283 = arith.mulf %278, %282 : vector<2x32xf32>
    %284 = arith.maximumf %220, %258 : vector<2x32xf32>
    %285 = arith.maximumf %221, %283 : vector<2x32xf32>
    %286 = vector.extract_strided_slice %19 {offsets = [0, 0], sizes = [2, 128], strides = [1, 1]} : vector<2x256xf32> to vector<2x128xf32>
    %287 = arith.truncf %258 : vector<2x32xf32> to vector<2x32xbf16>
    %cst_66 = arith.constant dense<0.000000e+00> : vector<2x128xf32>
    %288 = tpu.matmul %287, %1, %cst_66 {dimension_numbers = #tpu.dot_dimension_numbers<[1], [0], [0], [1], [0, 0, 1, 1], [], []>} : vector<2x32xbf16>, vector<32x128xbf16>, vector<2x128xf32> -> vector<2x128xf32>
    %289 = arith.addf %286, %288 : vector<2x128xf32>
    %290 = vector.broadcast %3 : vector<1x128xf32> to vector<2x128xf32>
    %291 = arith.addf %289, %290 : vector<2x128xf32>
    %292 = vector.extract_strided_slice %16 {offsets = [0, 128], sizes = [2, 128], strides = [1, 1]} : vector<2x256xf32> to vector<2x128xf32>
    %293 = arith.truncf %283 : vector<2x32xf32> to vector<2x32xbf16>
    %cst_67 = arith.constant dense<0.000000e+00> : vector<2x128xf32>
    %294 = tpu.matmul %293, %2, %cst_67 {dimension_numbers = #tpu.dot_dimension_numbers<[1], [0], [0], [1], [0, 0, 1, 1], [], []>} : vector<2x32xbf16>, vector<32x128xbf16>, vector<2x128xf32> -> vector<2x128xf32>
    %295 = arith.addf %292, %294 : vector<2x128xf32>
    %296 = vector.broadcast %4 : vector<1x128xf32> to vector<2x128xf32>
    %297 = arith.addf %295, %296 : vector<2x128xf32>
    %298 = vector.extract_strided_slice %291 {offsets = [0, 0], sizes = [2, 32], strides = [1, 1]} : vector<2x128xf32> to vector<2x32xf32>
    %299 = arith.negf %298 : vector<2x32xf32>
    %300 = math.exp %299 : vector<2x32xf32>
    %cst_68 = arith.constant 1.000000e+00 : f32
    %301 = vector.broadcast %cst_68 : f32 to vector<2x32xf32>
    %302 = arith.addf %301, %300 : vector<2x32xf32>
    %303 = arith.divf %301, %302 : vector<2x32xf32>
    %304 = vector.extract_strided_slice %291 {offsets = [0, 32], sizes = [2, 32], strides = [1, 1]} : vector<2x128xf32> to vector<2x32xf32>
    %305 = arith.negf %304 : vector<2x32xf32>
    %306 = math.exp %305 : vector<2x32xf32>
    %cst_69 = arith.constant 1.000000e+00 : f32
    %307 = vector.broadcast %cst_69 : f32 to vector<2x32xf32>
    %308 = arith.addf %307, %306 : vector<2x32xf32>
    %309 = arith.divf %307, %308 : vector<2x32xf32>
    %310 = vector.extract_strided_slice %291 {offsets = [0, 64], sizes = [2, 32], strides = [1, 1]} : vector<2x128xf32> to vector<2x32xf32>
    %311 = math.tanh %310 : vector<2x32xf32>
    %312 = vector.extract_strided_slice %291 {offsets = [0, 96], sizes = [2, 32], strides = [1, 1]} : vector<2x128xf32> to vector<2x32xf32>
    %313 = arith.negf %312 : vector<2x32xf32>
    %314 = math.exp %313 : vector<2x32xf32>
    %cst_70 = arith.constant 1.000000e+00 : f32
    %315 = vector.broadcast %cst_70 : f32 to vector<2x32xf32>
    %316 = arith.addf %315, %314 : vector<2x32xf32>
    %317 = arith.divf %315, %316 : vector<2x32xf32>
    %318 = arith.mulf %309, %256 : vector<2x32xf32>
    %319 = arith.mulf %303, %311 : vector<2x32xf32>
    %320 = arith.addf %318, %319 : vector<2x32xf32>
    %321 = math.tanh %320 : vector<2x32xf32>
    %322 = arith.mulf %317, %321 : vector<2x32xf32>
    %323 = vector.extract_strided_slice %297 {offsets = [0, 0], sizes = [2, 32], strides = [1, 1]} : vector<2x128xf32> to vector<2x32xf32>
    %324 = arith.negf %323 : vector<2x32xf32>
    %325 = math.exp %324 : vector<2x32xf32>
    %cst_71 = arith.constant 1.000000e+00 : f32
    %326 = vector.broadcast %cst_71 : f32 to vector<2x32xf32>
    %327 = arith.addf %326, %325 : vector<2x32xf32>
    %328 = arith.divf %326, %327 : vector<2x32xf32>
    %329 = vector.extract_strided_slice %297 {offsets = [0, 32], sizes = [2, 32], strides = [1, 1]} : vector<2x128xf32> to vector<2x32xf32>
    %330 = arith.negf %329 : vector<2x32xf32>
    %331 = math.exp %330 : vector<2x32xf32>
    %cst_72 = arith.constant 1.000000e+00 : f32
    %332 = vector.broadcast %cst_72 : f32 to vector<2x32xf32>
    %333 = arith.addf %332, %331 : vector<2x32xf32>
    %334 = arith.divf %332, %333 : vector<2x32xf32>
    %335 = vector.extract_strided_slice %297 {offsets = [0, 64], sizes = [2, 32], strides = [1, 1]} : vector<2x128xf32> to vector<2x32xf32>
    %336 = math.tanh %335 : vector<2x32xf32>
    %337 = vector.extract_strided_slice %297 {offsets = [0, 96], sizes = [2, 32], strides = [1, 1]} : vector<2x128xf32> to vector<2x32xf32>
    %338 = arith.negf %337 : vector<2x32xf32>
    %339 = math.exp %338 : vector<2x32xf32>
    %cst_73 = arith.constant 1.000000e+00 : f32
    %340 = vector.broadcast %cst_73 : f32 to vector<2x32xf32>
    %341 = arith.addf %340, %339 : vector<2x32xf32>
    %342 = arith.divf %340, %341 : vector<2x32xf32>
    %343 = arith.mulf %334, %281 : vector<2x32xf32>
    %344 = arith.mulf %328, %336 : vector<2x32xf32>
    %345 = arith.addf %343, %344 : vector<2x32xf32>
    %346 = math.tanh %345 : vector<2x32xf32>
    %347 = arith.mulf %342, %346 : vector<2x32xf32>
    %348 = arith.maximumf %284, %322 : vector<2x32xf32>
    %349 = arith.maximumf %285, %347 : vector<2x32xf32>
    %350 = vector.extract_strided_slice %22 {offsets = [0, 0], sizes = [2, 128], strides = [1, 1]} : vector<2x256xf32> to vector<2x128xf32>
    %351 = arith.truncf %322 : vector<2x32xf32> to vector<2x32xbf16>
    %cst_74 = arith.constant dense<0.000000e+00> : vector<2x128xf32>
    %352 = tpu.matmul %351, %1, %cst_74 {dimension_numbers = #tpu.dot_dimension_numbers<[1], [0], [0], [1], [0, 0, 1, 1], [], []>} : vector<2x32xbf16>, vector<32x128xbf16>, vector<2x128xf32> -> vector<2x128xf32>
    %353 = arith.addf %350, %352 : vector<2x128xf32>
    %354 = vector.broadcast %3 : vector<1x128xf32> to vector<2x128xf32>
    %355 = arith.addf %353, %354 : vector<2x128xf32>
    %356 = vector.extract_strided_slice %13 {offsets = [0, 128], sizes = [2, 128], strides = [1, 1]} : vector<2x256xf32> to vector<2x128xf32>
    %357 = arith.truncf %347 : vector<2x32xf32> to vector<2x32xbf16>
    %cst_75 = arith.constant dense<0.000000e+00> : vector<2x128xf32>
    %358 = tpu.matmul %357, %2, %cst_75 {dimension_numbers = #tpu.dot_dimension_numbers<[1], [0], [0], [1], [0, 0, 1, 1], [], []>} : vector<2x32xbf16>, vector<32x128xbf16>, vector<2x128xf32> -> vector<2x128xf32>
    %359 = arith.addf %356, %358 : vector<2x128xf32>
    %360 = vector.broadcast %4 : vector<1x128xf32> to vector<2x128xf32>
    %361 = arith.addf %359, %360 : vector<2x128xf32>
    %362 = vector.extract_strided_slice %355 {offsets = [0, 0], sizes = [2, 32], strides = [1, 1]} : vector<2x128xf32> to vector<2x32xf32>
    %363 = arith.negf %362 : vector<2x32xf32>
    %364 = math.exp %363 : vector<2x32xf32>
    %cst_76 = arith.constant 1.000000e+00 : f32
    %365 = vector.broadcast %cst_76 : f32 to vector<2x32xf32>
    %366 = arith.addf %365, %364 : vector<2x32xf32>
    %367 = arith.divf %365, %366 : vector<2x32xf32>
    %368 = vector.extract_strided_slice %355 {offsets = [0, 32], sizes = [2, 32], strides = [1, 1]} : vector<2x128xf32> to vector<2x32xf32>
    %369 = arith.negf %368 : vector<2x32xf32>
    %370 = math.exp %369 : vector<2x32xf32>
    %cst_77 = arith.constant 1.000000e+00 : f32
    %371 = vector.broadcast %cst_77 : f32 to vector<2x32xf32>
    %372 = arith.addf %371, %370 : vector<2x32xf32>
    %373 = arith.divf %371, %372 : vector<2x32xf32>
    %374 = vector.extract_strided_slice %355 {offsets = [0, 64], sizes = [2, 32], strides = [1, 1]} : vector<2x128xf32> to vector<2x32xf32>
    %375 = math.tanh %374 : vector<2x32xf32>
    %376 = vector.extract_strided_slice %355 {offsets = [0, 96], sizes = [2, 32], strides = [1, 1]} : vector<2x128xf32> to vector<2x32xf32>
    %377 = arith.negf %376 : vector<2x32xf32>
    %378 = math.exp %377 : vector<2x32xf32>
    %cst_78 = arith.constant 1.000000e+00 : f32
    %379 = vector.broadcast %cst_78 : f32 to vector<2x32xf32>
    %380 = arith.addf %379, %378 : vector<2x32xf32>
    %381 = arith.divf %379, %380 : vector<2x32xf32>
    %382 = arith.mulf %373, %320 : vector<2x32xf32>
    %383 = arith.mulf %367, %375 : vector<2x32xf32>
    %384 = arith.addf %382, %383 : vector<2x32xf32>
    %385 = math.tanh %384 : vector<2x32xf32>
    %386 = arith.mulf %381, %385 : vector<2x32xf32>
    %387 = vector.extract_strided_slice %361 {offsets = [0, 0], sizes = [2, 32], strides = [1, 1]} : vector<2x128xf32> to vector<2x32xf32>
    %388 = arith.negf %387 : vector<2x32xf32>
    %389 = math.exp %388 : vector<2x32xf32>
    %cst_79 = arith.constant 1.000000e+00 : f32
    %390 = vector.broadcast %cst_79 : f32 to vector<2x32xf32>
    %391 = arith.addf %390, %389 : vector<2x32xf32>
    %392 = arith.divf %390, %391 : vector<2x32xf32>
    %393 = vector.extract_strided_slice %361 {offsets = [0, 32], sizes = [2, 32], strides = [1, 1]} : vector<2x128xf32> to vector<2x32xf32>
    %394 = arith.negf %393 : vector<2x32xf32>
    %395 = math.exp %394 : vector<2x32xf32>
    %cst_80 = arith.constant 1.000000e+00 : f32
    %396 = vector.broadcast %cst_80 : f32 to vector<2x32xf32>
    %397 = arith.addf %396, %395 : vector<2x32xf32>
    %398 = arith.divf %396, %397 : vector<2x32xf32>
    %399 = vector.extract_strided_slice %361 {offsets = [0, 64], sizes = [2, 32], strides = [1, 1]} : vector<2x128xf32> to vector<2x32xf32>
    %400 = math.tanh %399 : vector<2x32xf32>
    %401 = vector.extract_strided_slice %361 {offsets = [0, 96], sizes = [2, 32], strides = [1, 1]} : vector<2x128xf32> to vector<2x32xf32>
    %402 = arith.negf %401 : vector<2x32xf32>
    %403 = math.exp %402 : vector<2x32xf32>
    %cst_81 = arith.constant 1.000000e+00 : f32
    %404 = vector.broadcast %cst_81 : f32 to vector<2x32xf32>
    %405 = arith.addf %404, %403 : vector<2x32xf32>
    %406 = arith.divf %404, %405 : vector<2x32xf32>
    %407 = arith.mulf %398, %345 : vector<2x32xf32>
    %408 = arith.mulf %392, %400 : vector<2x32xf32>
    %409 = arith.addf %407, %408 : vector<2x32xf32>
    %410 = math.tanh %409 : vector<2x32xf32>
    %411 = arith.mulf %406, %410 : vector<2x32xf32>
    %412 = arith.maximumf %348, %386 : vector<2x32xf32>
    %413 = arith.maximumf %349, %411 : vector<2x32xf32>
    %414 = vector.extract_strided_slice %25 {offsets = [0, 0], sizes = [2, 128], strides = [1, 1]} : vector<2x256xf32> to vector<2x128xf32>
    %415 = arith.truncf %386 : vector<2x32xf32> to vector<2x32xbf16>
    %cst_82 = arith.constant dense<0.000000e+00> : vector<2x128xf32>
    %416 = tpu.matmul %415, %1, %cst_82 {dimension_numbers = #tpu.dot_dimension_numbers<[1], [0], [0], [1], [0, 0, 1, 1], [], []>} : vector<2x32xbf16>, vector<32x128xbf16>, vector<2x128xf32> -> vector<2x128xf32>
    %417 = arith.addf %414, %416 : vector<2x128xf32>
    %418 = vector.broadcast %3 : vector<1x128xf32> to vector<2x128xf32>
    %419 = arith.addf %417, %418 : vector<2x128xf32>
    %420 = vector.extract_strided_slice %10 {offsets = [0, 128], sizes = [2, 128], strides = [1, 1]} : vector<2x256xf32> to vector<2x128xf32>
    %421 = arith.truncf %411 : vector<2x32xf32> to vector<2x32xbf16>
    %cst_83 = arith.constant dense<0.000000e+00> : vector<2x128xf32>
    %422 = tpu.matmul %421, %2, %cst_83 {dimension_numbers = #tpu.dot_dimension_numbers<[1], [0], [0], [1], [0, 0, 1, 1], [], []>} : vector<2x32xbf16>, vector<32x128xbf16>, vector<2x128xf32> -> vector<2x128xf32>
    %423 = arith.addf %420, %422 : vector<2x128xf32>
    %424 = vector.broadcast %4 : vector<1x128xf32> to vector<2x128xf32>
    %425 = arith.addf %423, %424 : vector<2x128xf32>
    %426 = vector.extract_strided_slice %419 {offsets = [0, 0], sizes = [2, 32], strides = [1, 1]} : vector<2x128xf32> to vector<2x32xf32>
    %427 = arith.negf %426 : vector<2x32xf32>
    %428 = math.exp %427 : vector<2x32xf32>
    %cst_84 = arith.constant 1.000000e+00 : f32
    %429 = vector.broadcast %cst_84 : f32 to vector<2x32xf32>
    %430 = arith.addf %429, %428 : vector<2x32xf32>
    %431 = arith.divf %429, %430 : vector<2x32xf32>
    %432 = vector.extract_strided_slice %419 {offsets = [0, 32], sizes = [2, 32], strides = [1, 1]} : vector<2x128xf32> to vector<2x32xf32>
    %433 = arith.negf %432 : vector<2x32xf32>
    %434 = math.exp %433 : vector<2x32xf32>
    %cst_85 = arith.constant 1.000000e+00 : f32
    %435 = vector.broadcast %cst_85 : f32 to vector<2x32xf32>
    %436 = arith.addf %435, %434 : vector<2x32xf32>
    %437 = arith.divf %435, %436 : vector<2x32xf32>
    %438 = vector.extract_strided_slice %419 {offsets = [0, 64], sizes = [2, 32], strides = [1, 1]} : vector<2x128xf32> to vector<2x32xf32>
    %439 = math.tanh %438 : vector<2x32xf32>
    %440 = vector.extract_strided_slice %419 {offsets = [0, 96], sizes = [2, 32], strides = [1, 1]} : vector<2x128xf32> to vector<2x32xf32>
    %441 = arith.negf %440 : vector<2x32xf32>
    %442 = math.exp %441 : vector<2x32xf32>
    %cst_86 = arith.constant 1.000000e+00 : f32
    %443 = vector.broadcast %cst_86 : f32 to vector<2x32xf32>
    %444 = arith.addf %443, %442 : vector<2x32xf32>
    %445 = arith.divf %443, %444 : vector<2x32xf32>
    %446 = arith.mulf %437, %384 : vector<2x32xf32>
    %447 = arith.mulf %431, %439 : vector<2x32xf32>
    %448 = arith.addf %446, %447 : vector<2x32xf32>
    %449 = math.tanh %448 : vector<2x32xf32>
    %450 = arith.mulf %445, %449 : vector<2x32xf32>
    %451 = vector.extract_strided_slice %425 {offsets = [0, 0], sizes = [2, 32], strides = [1, 1]} : vector<2x128xf32> to vector<2x32xf32>
    %452 = arith.negf %451 : vector<2x32xf32>
    %453 = math.exp %452 : vector<2x32xf32>
    %cst_87 = arith.constant 1.000000e+00 : f32
    %454 = vector.broadcast %cst_87 : f32 to vector<2x32xf32>
    %455 = arith.addf %454, %453 : vector<2x32xf32>
    %456 = arith.divf %454, %455 : vector<2x32xf32>
    %457 = vector.extract_strided_slice %425 {offsets = [0, 32], sizes = [2, 32], strides = [1, 1]} : vector<2x128xf32> to vector<2x32xf32>
    %458 = arith.negf %457 : vector<2x32xf32>
    %459 = math.exp %458 : vector<2x32xf32>
    %cst_88 = arith.constant 1.000000e+00 : f32
    %460 = vector.broadcast %cst_88 : f32 to vector<2x32xf32>
    %461 = arith.addf %460, %459 : vector<2x32xf32>
    %462 = arith.divf %460, %461 : vector<2x32xf32>
    %463 = vector.extract_strided_slice %425 {offsets = [0, 64], sizes = [2, 32], strides = [1, 1]} : vector<2x128xf32> to vector<2x32xf32>
    %464 = math.tanh %463 : vector<2x32xf32>
    %465 = vector.extract_strided_slice %425 {offsets = [0, 96], sizes = [2, 32], strides = [1, 1]} : vector<2x128xf32> to vector<2x32xf32>
    %466 = arith.negf %465 : vector<2x32xf32>
    %467 = math.exp %466 : vector<2x32xf32>
    %cst_89 = arith.constant 1.000000e+00 : f32
    %468 = vector.broadcast %cst_89 : f32 to vector<2x32xf32>
    %469 = arith.addf %468, %467 : vector<2x32xf32>
    %470 = arith.divf %468, %469 : vector<2x32xf32>
    %471 = arith.mulf %462, %409 : vector<2x32xf32>
    %472 = arith.mulf %456, %464 : vector<2x32xf32>
    %473 = arith.addf %471, %472 : vector<2x32xf32>
    %474 = math.tanh %473 : vector<2x32xf32>
    %475 = arith.mulf %470, %474 : vector<2x32xf32>
    %476 = arith.maximumf %412, %450 : vector<2x32xf32>
    %477 = arith.maximumf %413, %475 : vector<2x32xf32>
    %478 = vector.extract_strided_slice %28 {offsets = [0, 0], sizes = [2, 128], strides = [1, 1]} : vector<2x256xf32> to vector<2x128xf32>
    %479 = arith.truncf %450 : vector<2x32xf32> to vector<2x32xbf16>
    %cst_90 = arith.constant dense<0.000000e+00> : vector<2x128xf32>
    %480 = tpu.matmul %479, %1, %cst_90 {dimension_numbers = #tpu.dot_dimension_numbers<[1], [0], [0], [1], [0, 0, 1, 1], [], []>} : vector<2x32xbf16>, vector<32x128xbf16>, vector<2x128xf32> -> vector<2x128xf32>
    %481 = arith.addf %478, %480 : vector<2x128xf32>
    %482 = vector.broadcast %3 : vector<1x128xf32> to vector<2x128xf32>
    %483 = arith.addf %481, %482 : vector<2x128xf32>
    %484 = vector.extract_strided_slice %7 {offsets = [0, 128], sizes = [2, 128], strides = [1, 1]} : vector<2x256xf32> to vector<2x128xf32>
    %485 = arith.truncf %475 : vector<2x32xf32> to vector<2x32xbf16>
    %cst_91 = arith.constant dense<0.000000e+00> : vector<2x128xf32>
    %486 = tpu.matmul %485, %2, %cst_91 {dimension_numbers = #tpu.dot_dimension_numbers<[1], [0], [0], [1], [0, 0, 1, 1], [], []>} : vector<2x32xbf16>, vector<32x128xbf16>, vector<2x128xf32> -> vector<2x128xf32>
    %487 = arith.addf %484, %486 : vector<2x128xf32>
    %488 = vector.broadcast %4 : vector<1x128xf32> to vector<2x128xf32>
    %489 = arith.addf %487, %488 : vector<2x128xf32>
    %490 = vector.extract_strided_slice %483 {offsets = [0, 0], sizes = [2, 32], strides = [1, 1]} : vector<2x128xf32> to vector<2x32xf32>
    %491 = arith.negf %490 : vector<2x32xf32>
    %492 = math.exp %491 : vector<2x32xf32>
    %cst_92 = arith.constant 1.000000e+00 : f32
    %493 = vector.broadcast %cst_92 : f32 to vector<2x32xf32>
    %494 = arith.addf %493, %492 : vector<2x32xf32>
    %495 = arith.divf %493, %494 : vector<2x32xf32>
    %496 = vector.extract_strided_slice %483 {offsets = [0, 32], sizes = [2, 32], strides = [1, 1]} : vector<2x128xf32> to vector<2x32xf32>
    %497 = arith.negf %496 : vector<2x32xf32>
    %498 = math.exp %497 : vector<2x32xf32>
    %cst_93 = arith.constant 1.000000e+00 : f32
    %499 = vector.broadcast %cst_93 : f32 to vector<2x32xf32>
    %500 = arith.addf %499, %498 : vector<2x32xf32>
    %501 = arith.divf %499, %500 : vector<2x32xf32>
    %502 = vector.extract_strided_slice %483 {offsets = [0, 64], sizes = [2, 32], strides = [1, 1]} : vector<2x128xf32> to vector<2x32xf32>
    %503 = math.tanh %502 : vector<2x32xf32>
    %504 = vector.extract_strided_slice %483 {offsets = [0, 96], sizes = [2, 32], strides = [1, 1]} : vector<2x128xf32> to vector<2x32xf32>
    %505 = arith.negf %504 : vector<2x32xf32>
    %506 = math.exp %505 : vector<2x32xf32>
    %cst_94 = arith.constant 1.000000e+00 : f32
    %507 = vector.broadcast %cst_94 : f32 to vector<2x32xf32>
    %508 = arith.addf %507, %506 : vector<2x32xf32>
    %509 = arith.divf %507, %508 : vector<2x32xf32>
    %510 = arith.mulf %501, %448 : vector<2x32xf32>
    %511 = arith.mulf %495, %503 : vector<2x32xf32>
    %512 = arith.addf %510, %511 : vector<2x32xf32>
    %513 = math.tanh %512 : vector<2x32xf32>
    %514 = arith.mulf %509, %513 : vector<2x32xf32>
    %515 = vector.extract_strided_slice %489 {offsets = [0, 0], sizes = [2, 32], strides = [1, 1]} : vector<2x128xf32> to vector<2x32xf32>
    %516 = arith.negf %515 : vector<2x32xf32>
    %517 = math.exp %516 : vector<2x32xf32>
    %cst_95 = arith.constant 1.000000e+00 : f32
    %518 = vector.broadcast %cst_95 : f32 to vector<2x32xf32>
    %519 = arith.addf %518, %517 : vector<2x32xf32>
    %520 = arith.divf %518, %519 : vector<2x32xf32>
    %521 = vector.extract_strided_slice %489 {offsets = [0, 32], sizes = [2, 32], strides = [1, 1]} : vector<2x128xf32> to vector<2x32xf32>
    %522 = arith.negf %521 : vector<2x32xf32>
    %523 = math.exp %522 : vector<2x32xf32>
    %cst_96 = arith.constant 1.000000e+00 : f32
    %524 = vector.broadcast %cst_96 : f32 to vector<2x32xf32>
    %525 = arith.addf %524, %523 : vector<2x32xf32>
    %526 = arith.divf %524, %525 : vector<2x32xf32>
    %527 = vector.extract_strided_slice %489 {offsets = [0, 64], sizes = [2, 32], strides = [1, 1]} : vector<2x128xf32> to vector<2x32xf32>
    %528 = math.tanh %527 : vector<2x32xf32>
    %529 = vector.extract_strided_slice %489 {offsets = [0, 96], sizes = [2, 32], strides = [1, 1]} : vector<2x128xf32> to vector<2x32xf32>
    %530 = arith.negf %529 : vector<2x32xf32>
    %531 = math.exp %530 : vector<2x32xf32>
    %cst_97 = arith.constant 1.000000e+00 : f32
    %532 = vector.broadcast %cst_97 : f32 to vector<2x32xf32>
    %533 = arith.addf %532, %531 : vector<2x32xf32>
    %534 = arith.divf %532, %533 : vector<2x32xf32>
    %535 = arith.mulf %526, %473 : vector<2x32xf32>
    %536 = arith.mulf %520, %528 : vector<2x32xf32>
    %537 = arith.addf %535, %536 : vector<2x32xf32>
    %538 = math.tanh %537 : vector<2x32xf32>
    %539 = arith.mulf %534, %538 : vector<2x32xf32>
    %540 = arith.maximumf %476, %514 : vector<2x32xf32>
    %541 = arith.maximumf %477, %539 : vector<2x32xf32>
    %c0_98 = arith.constant 0 : index
    %c0_99 = arith.constant 0 : index
    %c0_100 = arith.constant 0 : index
    %542 = vector.load %arg1[%c0_98, %c0_99, %c0_100] : memref<8x2x32xbf16, #tpu.memory_space<vmem>>, vector<8x2x32xbf16>
    %543 = arith.extf %542 : vector<8x2x32xbf16> to vector<8x2x32xf32>
    %cst_101 = arith.constant 0.000000e+00 : f32
    %544 = vector.broadcast %cst_101 : f32 to vector<8x2x32xf32>
    %545 = arith.maximumf %543, %544 : vector<8x2x32xf32>
    %cst_102 = arith.constant dense<0xFF800000> : vector<2x32xf32>
    %546 = vector.multi_reduction <maximumf>, %545, %cst_102 [0] : vector<8x2x32xf32> to vector<2x32xf32>
    %c0_103 = arith.constant 0 : index
    %c0_104 = arith.constant 0 : index
    %547 = vector.load %arg7[%c0_103, %c0_104] : memref<96x4xbf16, #tpu.memory_space<vmem>>, vector<96x4xbf16>
    %548 = arith.truncf %546 : vector<2x32xf32> to vector<2x32xbf16>
    %549 = vector.extract_strided_slice %547 {offsets = [0, 0], sizes = [32, 4], strides = [1, 1]} : vector<96x4xbf16> to vector<32x4xbf16>
    %cst_105 = arith.constant dense<0.000000e+00> : vector<2x4xf32>
    %550 = tpu.matmul %548, %549, %cst_105 {dimension_numbers = #tpu.dot_dimension_numbers<[1], [0], [0], [1], [0, 0, 1, 1], [], []>} : vector<2x32xbf16>, vector<32x4xbf16>, vector<2x4xf32> -> vector<2x4xf32>
    %551 = arith.truncf %540 : vector<2x32xf32> to vector<2x32xbf16>
    %552 = vector.extract_strided_slice %547 {offsets = [32, 0], sizes = [32, 4], strides = [1, 1]} : vector<96x4xbf16> to vector<32x4xbf16>
    %cst_106 = arith.constant dense<0.000000e+00> : vector<2x4xf32>
    %553 = tpu.matmul %551, %552, %cst_106 {dimension_numbers = #tpu.dot_dimension_numbers<[1], [0], [0], [1], [0, 0, 1, 1], [], []>} : vector<2x32xbf16>, vector<32x4xbf16>, vector<2x4xf32> -> vector<2x4xf32>
    %554 = arith.addf %550, %553 : vector<2x4xf32>
    %555 = arith.truncf %541 : vector<2x32xf32> to vector<2x32xbf16>
    %556 = vector.extract_strided_slice %547 {offsets = [64, 0], sizes = [32, 4], strides = [1, 1]} : vector<96x4xbf16> to vector<32x4xbf16>
    %cst_107 = arith.constant dense<0.000000e+00> : vector<2x4xf32>
    %557 = tpu.matmul %555, %556, %cst_107 {dimension_numbers = #tpu.dot_dimension_numbers<[1], [0], [0], [1], [0, 0, 1, 1], [], []>} : vector<2x32xbf16>, vector<32x4xbf16>, vector<2x4xf32> -> vector<2x4xf32>
    %558 = arith.addf %554, %557 : vector<2x4xf32>
    %c0_108 = arith.constant 0 : index
    %c0_109 = arith.constant 0 : index
    %559 = vector.load %arg8[%c0_108, %c0_109] : memref<1x4xf32, #tpu.memory_space<vmem>>, vector<1x4xf32>
    %560 = vector.broadcast %559 : vector<1x4xf32> to vector<2x4xf32>
    %561 = arith.addf %558, %560 : vector<2x4xf32>
    %c0_110 = arith.constant 0 : index
    %c0_111 = arith.constant 0 : index
    %562 = vector.load %arg9[%c0_110, %c0_111] : memref<2x4xf32, #tpu.memory_space<vmem>>, vector<2x4xf32>
    tpu.vector_store %arg9[%c0_110, %c0_111], %561 {strides = array<i32>} : memref<2x4xf32, #tpu.memory_space<vmem>>, vector<2x4xf32>,
    return
  }
  func.func @transform_0(%arg0: i32) -> (i32, i32, i32) {
    %c0_i32 = arith.constant 0 : i32
    %c0_i32_0 = arith.constant 0 : i32
    %c0_i32_1 = arith.constant 0 : i32
    return %c0_i32, %arg0, %c0_i32_0 : i32, i32, i32
  }
  func.func @transform_1(%arg0: i32) -> (i32, i32) {
    %c0_i32 = arith.constant 0 : i32
    %c0_i32_0 = arith.constant 0 : i32
    %c0_i32_1 = arith.constant 0 : i32
    return %c0_i32, %c0_i32_0 : i32, i32
  }
  func.func @transform_2(%arg0: i32) -> (i32, i32) {
    %c0_i32 = arith.constant 0 : i32
    %c0_i32_0 = arith.constant 0 : i32
    %c0_i32_1 = arith.constant 0 : i32
    return %c0_i32, %c0_i32_0 : i32, i32
  }
  func.func @transform_3(%arg0: i32) -> (i32, i32) {
    %c0_i32 = arith.constant 0 : i32
    %c0_i32_0 = arith.constant 0 : i32
    %c0_i32_1 = arith.constant 0 : i32
    return %c0_i32, %c0_i32_0 : i32, i32
  }
  func.func @transform_4(%arg0: i32) -> (i32, i32) {
    %c0_i32 = arith.constant 0 : i32
    %c0_i32_0 = arith.constant 0 : i32
    %c0_i32_1 = arith.constant 0 : i32
    return %c0_i32, %c0_i32_0 : i32, i32
  }
  func.func @transform_5(%arg0: i32) -> (i32, i32) {
    %c0_i32 = arith.constant 0 : i32
    %c0_i32_0 = arith.constant 0 : i32
    %c0_i32_1 = arith.constant 0 : i32
    return %c0_i32, %c0_i32_0 : i32, i32
  }
  func.func @transform_6(%arg0: i32) -> (i32, i32) {
    %c0_i32 = arith.constant 0 : i32
    %c0_i32_0 = arith.constant 0 : i32
    %c0_i32_1 = arith.constant 0 : i32
    return %c0_i32, %c0_i32_0 : i32, i32
  }
  func.func @transform_7(%arg0: i32) -> (i32, i32) {
    %c0_i32 = arith.constant 0 : i32
    %c0_i32_0 = arith.constant 0 : i32
    %c0_i32_1 = arith.constant 0 : i32
    return %c0_i32, %c0_i32_0 : i32, i32
  }
  func.func @transform_8(%arg0: i32) -> (i32, i32) {
    %c0_i32 = arith.constant 0 : i32
    %c0_i32_0 = arith.constant 0 : i32
    return %arg0, %c0_i32 : i32, i32
  }
}

</mosaic_0001>

<llo_original>
// kernel: tpu_custom_call.1
$region0: #{tpu_custom_call.1}
  #allocation0 [shape = 'u32[]', space=smem, size = 0x4, offset = 0x4, fixed_abs, tag = 'smem constant byte address 0x4 - core index']
  #allocation1 [shape = 'u32[144,128]{1,0:T(1,128)}', space=vmem, size = 0x12000, scoped, tag = 'internal scratch']
  %s0 = inlined_call_operand.hbm [shape: bf16[8,2,32], index: 0, kind: input, shape index: {}]
  %s1 = inlined_call_operand.vmem [shape: bf16[32,256], index: 1, kind: input, shape index: {}]
  %s2 = inlined_call_operand.vmem [shape: bf16[32,128], index: 2, kind: input, shape index: {}]
  %s3 = inlined_call_operand.vmem [shape: f32[1,128], index: 3, kind: input, shape index: {}]
  %s4 = inlined_call_operand.vmem [shape: bf16[32,128], index: 4, kind: input, shape index: {}]
  %s5 = inlined_call_operand.vmem [shape: f32[1,128], index: 5, kind: input, shape index: {}]
  %s6 = inlined_call_operand.vmem [shape: bf16[96,4], index: 6, kind: input, shape index: {}]
  %s7 = inlined_call_operand.vmem [shape: f32[1,4], index: 7, kind: input, shape index: {}]
  %s8 = inlined_call_operand.hbm [shape: f32[2,4], index: 8, kind: output, shape index: {}]
  %s9 = sld [smem:[#allocation0]]
  $region46: #{tpu_custom_call.1} parent=0
    _
  %s11 = ssub.s32 1, %s9
  %s12 = scalar_select 0, %s11, %s9
  $region1: #{tpu_custom_call.1} parent=0
    #allocation2 [shape = 'u8[4096]{0}', space=vmem, size = 0x1000, scoped, tag = 'input window, operand 0, single buffered']
    #allocation3 [shape = 's32[1]{0}', space=sflag, size = 0x4, scoped, tag = 'scoped memory for tpu_custom_call.1']
    #allocation4 [shape = 's32[1]{0}', space=sflag, size = 0x4, scoped, tag = 'scoped memory for tpu_custom_call.1']
    #allocation5 [shape = 'u8[1024]{0}', space=vmem, size = 0x400, scoped, tag = 'output window, operand 0, single buffered']
    %13 = vsyncpa [#allocation3], 0
    %14 = vsyncpa [#allocation4], 0
    // Predicated region
    $region2: #{tpu_custom_call.1} parent=1 // pred_check
      _
    $region3: #{tpu_custom_call.1} parent=1 // pred_check_branch
      %16 = sbr.rel (0) target = $region5
    $region4: #{tpu_custom_call.1} parent=1 // pred_region
      %s18 = ssub.s32 128, 128
      %19 = vsyncadd [#allocation3], %s18
      %s20 = sshll.u32 [#allocation2], 4
      %s21 = int_to_ptr.vmem [resolvable:$true] %s20
      %26 = dma.hbm_to_vmem [thread:$0]  %s0, 128, %s21, [#allocation3], 16, 16, 1
    $region5: #{tpu_custom_call.1} parent=1 // pred_fallthru
      _
    // Predicated region
    $region6: #{tpu_custom_call.1} parent=1 // pred_check
      _
    $region7: #{tpu_custom_call.1} parent=1 // pred_check_branch
      %28 = sbr.rel (0) target = $region9
    $region8: #{tpu_custom_call.1} parent=1 // pred_region
      _
    $region9: #{tpu_custom_call.1} parent=1 // pred_fallthru
      _
    // Predicated region
    $region10: #{tpu_custom_call.1} parent=1 // pred_check
      _
    $region11: #{tpu_custom_call.1} parent=1 // pred_check_branch
      %30 = sbr.rel (0) target = $region13
    $region12: #{tpu_custom_call.1} parent=1 // pred_region
      _
    $region13: #{tpu_custom_call.1} parent=1 // pred_fallthru
      _
    // Predicated region
    $region14: #{tpu_custom_call.1} parent=1 // pred_check
      _
    $region15: #{tpu_custom_call.1} parent=1 // pred_check_branch
      %32 = sbr.rel (0) target = $region17
    $region16: #{tpu_custom_call.1} parent=1 // pred_region
      _
    $region17: #{tpu_custom_call.1} parent=1 // pred_fallthru
      _
    // Predicated region
    $region18: #{tpu_custom_call.1} parent=1 // pred_check
      _
    $region19: #{tpu_custom_call.1} parent=1 // pred_check_branch
      %34 = sbr.rel (0) target = $region21
    $region20: #{tpu_custom_call.1} parent=1 // pred_region
      _
    $region21: #{tpu_custom_call.1} parent=1 // pred_fallthru
      _
    // Predicated region
    $region22: #{tpu_custom_call.1} parent=1 // pred_check
      _
    $region23: #{tpu_custom_call.1} parent=1 // pred_check_branch
      %36 = sbr.rel (0) target = $region25
    $region24: #{tpu_custom_call.1} parent=1 // pred_region
      _
    $region25: #{tpu_custom_call.1} parent=1 // pred_fallthru
      _
    // Predicated region
    $region26: #{tpu_custom_call.1} parent=1 // pred_check
      _
    $region27: #{tpu_custom_call.1} parent=1 // pred_check_branch
      %38 = sbr.rel (0) target = $region29
    $region28: #{tpu_custom_call.1} parent=1 // pred_region
      _
    $region29: #{tpu_custom_call.1} parent=1 // pred_fallthru
      _
    // Predicated region
    $region30: #{tpu_custom_call.1} parent=1 // pred_check
      _
    $region31: #{tpu_custom_call.1} parent=1 // pred_check_branch
      %40 = sbr.rel (0) target = $region33
    $region32: #{tpu_custom_call.1} parent=1 // pred_region
      _
    $region33: #{tpu_custom_call.1} parent=1 // pred_fallthru
      _
    // Predicated region
    $region34: #{tpu_custom_call.1} parent=1 // pred_check
      _
    $region35: #{tpu_custom_call.1} parent=1 // pred_check_branch
      %42 = sbr.rel (0) target = $region37
    $region36: #{tpu_custom_call.1} parent=1 // pred_region
      %43 = dma.done [#allocation3], 128
    $region37: #{tpu_custom_call.1} parent=1 // pred_fallthru
      _
    %v45 = vld [vmem:[%s1] sm:$0xff]
    %v46 = vld [vmem:[%s1 + $0x8] sm:$0xff]
    %v47 = vld [vmem:[%s1 + $0x10] sm:$0xff]
    %v48 = vld [vmem:[%s1 + $0x18] sm:$0xff]
    %v49 = vld [vmem:[%s2] sm:$0xf]
    %v50 = vld [vmem:[%s2 + $0x4] sm:$0xf]
    %v51 = vld [vmem:[%s2 + $0x8] sm:$0xf]
    %v52 = vld [vmem:[%s2 + $0xc] sm:$0xf]
    %v53 = vld [vmem:[%s4] sm:$0xf]
    %v54 = vld [vmem:[%s4 + $0x4] sm:$0xf]
    %v55 = vld [vmem:[%s4 + $0x8] sm:$0xf]
    %v56 = vld [vmem:[%s4 + $0xc] sm:$0xf]
    %v57 = vld [vmem:[%s3] sm:$0x1]
    %v58 = vld [vmem:[%s5] sm:$0x1]
    %v59 = vld [vmem:[#allocation2] sm:$0x1]
    %v64 = vunpack.c.l.b16 %v45
    %v65 = vunpack.c.h.b16 %v45
    %v66 = vunpack.c.l.b16 %v46
    %v67 = vunpack.c.h.b16 %v46
    %v68 = vunpack.c.l.b16 %v47
    %v69 = vunpack.c.h.b16 %v47
    %v70 = vunpack.c.l.b16 %v48
    %v71 = vunpack.c.h.b16 %v48
    %v72 = vpack.c.b16 %v66, %v64
    %v73 = vpack.c.b16 %v67, %v65
    %v74 = vpack.c.b16 %v70, %v68
    %v75 = vpack.c.b16 %v71, %v69
    %vm80 = vcmask 261120
    %v82 = vsel %vm80, %v59, 0
    %84 = vmatprep.subr.bf16.mxu0 %v73
    %85 = vmatpush1.bf16.msra.mxu0 %v72
    %86 = vmatprep.subr.bf16.mxu0 %v75
    %87 = vmatpush1.bf16.msra.mxu0 %v74
    %88 = vmatprep.subr.bf16.mxu0 0
    %89 = vmatpush1.bf16.msra.mxu0 0
    %90 = vmatprep.subr.bf16.mxu0 0
    %91 = vmatpush1.bf16.msra.mxu0 0
    %92 = vmatprep.subr.bf16.mxu0 0
    %93 = vmatpush1.bf16.msra.mxu0 0
    %94 = vmatprep.subr.bf16.mxu0 0
    %95 = vmatpush1.bf16.msra.mxu0 0
    %96 = vmatprep.subr.bf16.mxu0 0
    %97 = vmatpush1.bf16.msra.mxu0 0
    %98 = vmatprep.subr.bf16.mxu0 0
    %99 = vmatpush1.bf16.msra.mxu0 0
    %100 = vmatprep.subr.bf16.mxu0 0
    %101 = vmatpush1.bf16.msra.mxu0 0
    %102 = vmatprep.subr.bf16.mxu0 0
    %103 = vmatpush1.bf16.msra.mxu0 0
    %104 = vmatprep.subr.bf16.mxu0 0
    %105 = vmatpush1.bf16.msra.mxu0 0
    %106 = vmatprep.subr.bf16.mxu0 0
    %107 = vmatpush1.bf16.msra.mxu0 0
    %108 = vmatprep.subr.bf16.mxu0 0
    %109 = vmatpush1.bf16.msra.mxu0 0
    %110 = vmatprep.subr.bf16.mxu0 0
    %111 = vmatpush1.bf16.msra.mxu0 0
    %112 = vmatprep.subr.bf16.mxu0 0
    %113 = vmatpush1.bf16.msra.mxu0 0
    %114 = vmatprep.subr.bf16.mxu0 0
    %115 = vmatpush1.bf16.msra.mxu0 0
    %116 = vmatprep.mubr.bf16.mxu0 0
    %117 = vmatmul.mubr.bf16.gmra.mrb[0].mxu0 %v82
    %v118 = vpop.f32.mrb[0].mxu0
    %v119 = vadd.f32 0.0, %v118
    %v120 = vpop.f32.mrb[0].mxu0
    %v121 = vadd.f32 0.0, %v120
    %v122 = vpop.f32.mrb[0].mxu0
    %v123 = vpop.f32.mrb[0].mxu0
    %124 = vdwg.mxu0
    %s125 = scalar_lea.vmem [#allocation2], 1
    %v126 = vld [vmem:[%s125] sm:$0x1]
    %v128 = vsel %vm80, %v126, 0
    %130 = vmatprep.subr.bf16.mxu0 %v73
    %131 = vmatpush1.bf16.msra.mxu0 %v72
    %132 = vmatprep.subr.bf16.mxu0 %v75
    %133 = vmatpush1.bf16.msra.mxu0 %v74
    %134 = vmatprep.subr.bf16.mxu0 0
    %135 = vmatpush1.bf16.msra.mxu0 0
    %136 = vmatprep.subr.bf16.mxu0 0
    %137 = vmatpush1.bf16.msra.mxu0 0
    %138 = vmatprep.subr.bf16.mxu0 0
    %139 = vmatpush1.bf16.msra.mxu0 0
    %140 = vmatprep.subr.bf16.mxu0 0
    %141 = vmatpush1.bf16.msra.mxu0 0
    %142 = vmatprep.subr.bf16.mxu0 0
    %143 = vmatpush1.bf16.msra.mxu0 0
    %144 = vmatprep.subr.bf16.mxu0 0
    %145 = vmatpush1.bf16.msra.mxu0 0
    %146 = vmatprep.subr.bf16.mxu0 0
    %147 = vmatpush1.bf16.msra.mxu0 0
    %148 = vmatprep.subr.bf16.mxu0 0
    %149 = vmatpush1.bf16.msra.mxu0 0
    %150 = vmatprep.subr.bf16.mxu0 0
    %151 = vmatpush1.bf16.msra.mxu0 0
    %152 = vmatprep.subr.bf16.mxu0 0
    %153 = vmatpush1.bf16.msra.mxu0 0
    %154 = vmatprep.subr.bf16.mxu0 0
    %155 = vmatpush1.bf16.msra.mxu0 0
    %156 = vmatprep.subr.bf16.mxu0 0
    %157 = vmatpush1.bf16.msra.mxu0 0
    %158 = vmatprep.subr.bf16.mxu0 0
    %159 = vmatpush1.bf16.msra.mxu0 0
    %160 = vmatprep.subr.bf16.mxu0 0
    %161 = vmatpush1.bf16.msra.mxu0 0
    %162 = vmatprep.mubr.bf16.mxu0 0
    %163 = vmatmul.mubr.bf16.gmra.mrb[0].mxu0 %v128
    %v164 = vpop.f32.mrb[0].mxu0
    %v165 = vadd.f32 0.0, %v164
    %v166 = vpop.f32.mrb[0].mxu0
    %v167 = vadd.f32 0.0, %v166
    %v168 = vpop.f32.mrb[0].mxu0
    %v169 = vpop.f32.mrb[0].mxu0
    %170 = vdwg.mxu0
    %s171 = scalar_lea.vmem [#allocation2], 2
    %v172 = vld [vmem:[%s171] sm:$0x1]
    %v174 = vsel %vm80, %v172, 0
    %176 = vmatprep.subr.bf16.mxu0 %v73
    %177 = vmatpush1.bf16.msra.mxu0 %v72
    %178 = vmatprep.subr.bf16.mxu0 %v75
    %179 = vmatpush1.bf16.msra.mxu0 %v74
    %180 = vmatprep.subr.bf16.mxu0 0
    %181 = vmatpush1.bf16.msra.mxu0 0
    %182 = vmatprep.subr.bf16.mxu0 0
    %183 = vmatpush1.bf16.msra.mxu0 0
    %184 = vmatprep.subr.bf16.mxu0 0
    %185 = vmatpush1.bf16.msra.mxu0 0
    %186 = vmatprep.subr.bf16.mxu0 0
    %187 = vmatpush1.bf16.msra.mxu0 0
    %188 = vmatprep.subr.bf16.mxu0 0
    %189 = vmatpush1.bf16.msra.mxu0 0
    %190 = vmatprep.subr.bf16.mxu0 0
    %191 = vmatpush1.bf16.msra.mxu0 0
    %192 = vmatprep.subr.bf16.mxu0 0
    %193 = vmatpush1.bf16.msra.mxu0 0
    %194 = vmatprep.subr.bf16.mxu0 0
    %195 = vmatpush1.bf16.msra.mxu0 0
    %196 = vmatprep.subr.bf16.mxu0 0
    %197 = vmatpush1.bf16.msra.mxu0 0
    %198 = vmatprep.subr.bf16.mxu0 0
    %199 = vmatpush1.bf16.msra.mxu0 0
    %200 = vmatprep.subr.bf16.mxu0 0
    %201 = vmatpush1.bf16.msra.mxu0 0
    %202 = vmatprep.subr.bf16.mxu0 0
    %203 = vmatpush1.bf16.msra.mxu0 0
    %204 = vmatprep.subr.bf16.mxu0 0
    %205 = vmatpush1.bf16.msra.mxu0 0
    %206 = vmatprep.subr.bf16.mxu0 0
    %207 = vmatpush1.bf16.msra.mxu0 0
    %208 = vmatprep.mubr.bf16.mxu0 0
    %209 = vmatmul.mubr.bf16.gmra.mrb[0].mxu0 %v174
    %v210 = vpop.f32.mrb[0].mxu0
    %v211 = vadd.f32 0.0, %v210
    %v212 = vpop.f32.mrb[0].mxu0
    %v213 = vadd.f32 0.0, %v212
    %v214 = vpop.f32.mrb[0].mxu0
    %v215 = vpop.f32.mrb[0].mxu0
    %216 = vdwg.mxu0
    %s217 = scalar_lea.vmem [#allocation2], 3
    %v218 = vld [vmem:[%s217] sm:$0x1]
    %v220 = vsel %vm80, %v218, 0
    %222 = vmatprep.subr.bf16.mxu0 %v73
    %223 = vmatpush1.bf16.msra.mxu0 %v72
    %224 = vmatprep.subr.bf16.mxu0 %v75
    %225 = vmatpush1.bf16.msra.mxu0 %v74
    %226 = vmatprep.subr.bf16.mxu0 0
    %227 = vmatpush1.bf16.msra.mxu0 0
    %228 = vmatprep.subr.bf16.mxu0 0
    %229 = vmatpush1.bf16.msra.mxu0 0
    %230 = vmatprep.subr.bf16.mxu0 0
    %231 = vmatpush1.bf16.msra.mxu0 0
    %232 = vmatprep.subr.bf16.mxu0 0
    %233 = vmatpush1.bf16.msra.mxu0 0
    %234 = vmatprep.subr.bf16.mxu0 0
    %235 = vmatpush1.bf16.msra.mxu0 0
    %236 = vmatprep.subr.bf16.mxu0 0
    %237 = vmatpush1.bf16.msra.mxu0 0
    %238 = vmatprep.subr.bf16.mxu0 0
    %239 = vmatpush1.bf16.msra.mxu0 0
    %240 = vmatprep.subr.bf16.mxu0 0
    %241 = vmatpush1.bf16.msra.mxu0 0
    %242 = vmatprep.subr.bf16.mxu0 0
    %243 = vmatpush1.bf16.msra.mxu0 0
    %244 = vmatprep.subr.bf16.mxu0 0
    %245 = vmatpush1.bf16.msra.mxu0 0
    %246 = vmatprep.subr.bf16.mxu0 0
    %247 = vmatpush1.bf16.msra.mxu0 0
    %248 = vmatprep.subr.bf16.mxu0 0
    %249 = vmatpush1.bf16.msra.mxu0 0
    %250 = vmatprep.subr.bf16.mxu0 0
    %251 = vmatpush1.bf16.msra.mxu0 0
    %252 = vmatprep.subr.bf16.mxu0 0
    %253 = vmatpush1.bf16.msra.mxu0 0
    %254 = vmatprep.mubr.bf16.mxu0 0
    %255 = vmatmul.mubr.bf16.gmra.mrb[0].mxu0 %v220
    %v256 = vpop.f32.mrb[0].mxu0
    %v257 = vadd.f32 0.0, %v256
    %v258 = vpop.f32.mrb[0].mxu0
    %v259 = vadd.f32 0.0, %v258
    %v260 = vpop.f32.mrb[0].mxu0
    %v261 = vpop.f32.mrb[0].mxu0
    %262 = vdwg.mxu0
    %s263 = scalar_lea.vmem [#allocation2], 4
    %v264 = vld [vmem:[%s263] sm:$0x1]
    %v266 = vsel %vm80, %v264, 0
    %268 = vmatprep.subr.bf16.mxu0 %v73
    %269 = vmatpush1.bf16.msra.mxu0 %v72
    %270 = vmatprep.subr.bf16.mxu0 %v75
    %271 = vmatpush1.bf16.msra.mxu0 %v74
    %272 = vmatprep.subr.bf16.mxu0 0
    %273 = vmatpush1.bf16.msra.mxu0 0
    %274 = vmatprep.subr.bf16.mxu0 0
    %275 = vmatpush1.bf16.msra.mxu0 0
    %276 = vmatprep.subr.bf16.mxu0 0
    %277 = vmatpush1.bf16.msra.mxu0 0
    %278 = vmatprep.subr.bf16.mxu0 0
    %279 = vmatpush1.bf16.msra.mxu0 0
    %280 = vmatprep.subr.bf16.mxu0 0
    %281 = vmatpush1.bf16.msra.mxu0 0
    %282 = vmatprep.subr.bf16.mxu0 0
    %283 = vmatpush1.bf16.msra.mxu0 0
    %284 = vmatprep.subr.bf16.mxu0 0
    %285 = vmatpush1.bf16.msra.mxu0 0
    %286 = vmatprep.subr.bf16.mxu0 0
    %287 = vmatpush1.bf16.msra.mxu0 0
    %288 = vmatprep.subr.bf16.mxu0 0
    %289 = vmatpush1.bf16.msra.mxu0 0
    %290 = vmatprep.subr.bf16.mxu0 0
    %291 = vmatpush1.bf16.msra.mxu0 0
    %292 = vmatprep.subr.bf16.mxu0 0
    %293 = vmatpush1.bf16.msra.mxu0 0
    %294 = vmatprep.subr.bf16.mxu0 0
    %295 = vmatpush1.bf16.msra.mxu0 0
    %296 = vmatprep.subr.bf16.mxu0 0
    %297 = vmatpush1.bf16.msra.mxu0 0
    %298 = vmatprep.subr.bf16.mxu0 0
    %299 = vmatpush1.bf16.msra.mxu0 0
    %300 = vmatprep.mubr.bf16.mxu0 0
    %301 = vmatmul.mubr.bf16.gmra.mrb[0].mxu0 %v266
    %v302 = vpop.f32.mrb[0].mxu0
    %v303 = vadd.f32 0.0, %v302
    %v304 = vpop.f32.mrb[0].mxu0
    %v305 = vadd.f32 0.0, %v304
    %v306 = vpop.f32.mrb[0].mxu0
    %v307 = vpop.f32.mrb[0].mxu0
    %308 = vdwg.mxu0
    %s309 = scalar_lea.vmem [#allocation2], 5
    %v310 = vld [vmem:[%s309] sm:$0x1]
    %v312 = vsel %vm80, %v310, 0
    %314 = vmatprep.subr.bf16.mxu0 %v73
    %315 = vmatpush1.bf16.msra.mxu0 %v72
    %316 = vmatprep.subr.bf16.mxu0 %v75
    %317 = vmatpush1.bf16.msra.mxu0 %v74
    %318 = vmatprep.subr.bf16.mxu0 0
    %319 = vmatpush1.bf16.msra.mxu0 0
    %320 = vmatprep.subr.bf16.mxu0 0
    %321 = vmatpush1.bf16.msra.mxu0 0
    %322 = vmatprep.subr.bf16.mxu0 0
    %323 = vmatpush1.bf16.msra.mxu0 0
    %324 = vmatprep.subr.bf16.mxu0 0
    %325 = vmatpush1.bf16.msra.mxu0 0
    %326 = vmatprep.subr.bf16.mxu0 0
    %327 = vmatpush1.bf16.msra.mxu0 0
    %328 = vmatprep.subr.bf16.mxu0 0
    %329 = vmatpush1.bf16.msra.mxu0 0
    %330 = vmatprep.subr.bf16.mxu0 0
    %331 = vmatpush1.bf16.msra.mxu0 0
    %332 = vmatprep.subr.bf16.mxu0 0
    %333 = vmatpush1.bf16.msra.mxu0 0
    %334 = vmatprep.subr.bf16.mxu0 0
    %335 = vmatpush1.bf16.msra.mxu0 0
    %336 = vmatprep.subr.bf16.mxu0 0
    %337 = vmatpush1.bf16.msra.mxu0 0
    %338 = vmatprep.subr.bf16.mxu0 0
    %339 = vmatpush1.bf16.msra.mxu0 0
    %340 = vmatprep.subr.bf16.mxu0 0
    %341 = vmatpush1.bf16.msra.mxu0 0
    %342 = vmatprep.subr.bf16.mxu0 0
    %343 = vmatpush1.bf16.msra.mxu0 0
    %344 = vmatprep.subr.bf16.mxu0 0
    %345 = vmatpush1.bf16.msra.mxu0 0
    %346 = vmatprep.mubr.bf16.mxu0 0
    %347 = vmatmul.mubr.bf16.gmra.mrb[0].mxu0 %v312
    %v348 = vpop.f32.mrb[0].mxu0
    %v349 = vadd.f32 0.0, %v348
    %v350 = vpop.f32.mrb[0].mxu0
    %v351 = vadd.f32 0.0, %v350
    %v352 = vpop.f32.mrb[0].mxu0
    %v353 = vpop.f32.mrb[0].mxu0
    %354 = vdwg.mxu0
    %s355 = scalar_lea.vmem [#allocation2], 6
    %v356 = vld [vmem:[%s355] sm:$0x1]
    %v358 = vsel %vm80, %v356, 0
    %360 = vmatprep.subr.bf16.mxu0 %v73
    %361 = vmatpush1.bf16.msra.mxu0 %v72
    %362 = vmatprep.subr.bf16.mxu0 %v75
    %363 = vmatpush1.bf16.msra.mxu0 %v74
    %364 = vmatprep.subr.bf16.mxu0 0
    %365 = vmatpush1.bf16.msra.mxu0 0
    %366 = vmatprep.subr.bf16.mxu0 0
    %367 = vmatpush1.bf16.msra.mxu0 0
    %368 = vmatprep.subr.bf16.mxu0 0
    %369 = vmatpush1.bf16.msra.mxu0 0
    %370 = vmatprep.subr.bf16.mxu0 0
    %371 = vmatpush1.bf16.msra.mxu0 0
    %372 = vmatprep.subr.bf16.mxu0 0
    %373 = vmatpush1.bf16.msra.mxu0 0
    %374 = vmatprep.subr.bf16.mxu0 0
    %375 = vmatpush1.bf16.msra.mxu0 0
    %376 = vmatprep.subr.bf16.mxu0 0
    %377 = vmatpush1.bf16.msra.mxu0 0
    %378 = vmatprep.subr.bf16.mxu0 0
    %379 = vmatpush1.bf16.msra.mxu0 0
    %380 = vmatprep.subr.bf16.mxu0 0
    %381 = vmatpush1.bf16.msra.mxu0 0
    %382 = vmatprep.subr.bf16.mxu0 0
    %383 = vmatpush1.bf16.msra.mxu0 0
    %384 = vmatprep.subr.bf16.mxu0 0
    %385 = vmatpush1.bf16.msra.mxu0 0
    %386 = vmatprep.subr.bf16.mxu0 0
    %387 = vmatpush1.bf16.msra.mxu0 0
    %388 = vmatprep.subr.bf16.mxu0 0
    %389 = vmatpush1.bf16.msra.mxu0 0
    %390 = vmatprep.subr.bf16.mxu0 0
    %391 = vmatpush1.bf16.msra.mxu0 0
    %392 = vmatprep.mubr.bf16.mxu0 0
    %393 = vmatmul.mubr.bf16.gmra.mrb[0].mxu0 %v358
    %v394 = vpop.f32.mrb[0].mxu0
    %v395 = vadd.f32 0.0, %v394
    %v396 = vpop.f32.mrb[0].mxu0
    %v397 = vadd.f32 0.0, %v396
    %v398 = vpop.f32.mrb[0].mxu0
    %v399 = vpop.f32.mrb[0].mxu0
    %400 = vdwg.mxu0
    %s401 = scalar_lea.vmem [#allocation2], 7
    %v402 = vld [vmem:[%s401] sm:$0x1]
    %v404 = vsel %vm80, %v402, 0
    %406 = vmatprep.subr.bf16.mxu0 %v73
    %407 = vmatpush1.bf16.msra.mxu0 %v72
    %408 = vmatprep.subr.bf16.mxu0 %v75
    %409 = vmatpush1.bf16.msra.mxu0 %v74
    %410 = vmatprep.subr.bf16.mxu0 0
    %411 = vmatpush1.bf16.msra.mxu0 0
    %412 = vmatprep.subr.bf16.mxu0 0
    %413 = vmatpush1.bf16.msra.mxu0 0
    %414 = vmatprep.subr.bf16.mxu0 0
    %415 = vmatpush1.bf16.msra.mxu0 0
    %416 = vmatprep.subr.bf16.mxu0 0
    %417 = vmatpush1.bf16.msra.mxu0 0
    %418 = vmatprep.subr.bf16.mxu0 0
    %419 = vmatpush1.bf16.msra.mxu0 0
    %420 = vmatprep.subr.bf16.mxu0 0
    %421 = vmatpush1.bf16.msra.mxu0 0
    %422 = vmatprep.subr.bf16.mxu0 0
    %423 = vmatpush1.bf16.msra.mxu0 0
    %424 = vmatprep.subr.bf16.mxu0 0
    %425 = vmatpush1.bf16.msra.mxu0 0
    %426 = vmatprep.subr.bf16.mxu0 0
    %427 = vmatpush1.bf16.msra.mxu0 0
    %428 = vmatprep.subr.bf16.mxu0 0
    %429 = vmatpush1.bf16.msra.mxu0 0
    %430 = vmatprep.subr.bf16.mxu0 0
    %431 = vmatpush1.bf16.msra.mxu0 0
    %432 = vmatprep.subr.bf16.mxu0 0
    %433 = vmatpush1.bf16.msra.mxu0 0
    %434 = vmatprep.subr.bf16.mxu0 0
    %435 = vmatpush1.bf16.msra.mxu0 0
    %436 = vmatprep.subr.bf16.mxu0 0
    %437 = vmatpush1.bf16.msra.mxu0 0
    %438 = vmatprep.mubr.bf16.mxu0 0
    %439 = vmatmul.mubr.bf16.gmra.mrb[0].mxu0 %v404
    %v440 = vpop.f32.mrb[0].mxu0
    %v441 = vadd.f32 0.0, %v440
    %v442 = vpop.f32.mrb[0].mxu0
    %v443 = vadd.f32 0.0, %v442
    %v444 = vpop.f32.mrb[0].mxu0
    %v445 = vpop.f32.mrb[0].mxu0
    %446 = vdwg.mxu0
    %v451 = vunpack.c.l.b16 %v49
    %v452 = vunpack.c.l.b16 %v50
    %v453 = vunpack.c.l.b16 %v51
    %v454 = vunpack.c.l.b16 %v52
    %v455 = vpack.c.b16 %v452, %v451
    %v456 = vpack.c.b16 %v454, %v453
    %v460 = vsel %vm80, 0, 0
    %462 = vmatprep.subr.bf16.mxu0 0
    %463 = vmatpush1.bf16.msra.mxu0 %v455
    %464 = vmatprep.subr.bf16.mxu0 0
    %465 = vmatpush1.bf16.msra.mxu0 %v456
    %466 = vmatprep.subr.bf16.mxu0 0
    %467 = vmatpush1.bf16.msra.mxu0 0
    %468 = vmatprep.subr.bf16.mxu0 0
    %469 = vmatpush1.bf16.msra.mxu0 0
    %470 = vmatprep.subr.bf16.mxu0 0
    %471 = vmatpush1.bf16.msra.mxu0 0
    %472 = vmatprep.subr.bf16.mxu0 0
    %473 = vmatpush1.bf16.msra.mxu0 0
    %474 = vmatprep.subr.bf16.mxu0 0
    %475 = vmatpush1.bf16.msra.mxu0 0
    %476 = vmatprep.subr.bf16.mxu0 0
    %477 = vmatpush1.bf16.msra.mxu0 0
    %478 = vmatprep.subr.bf16.mxu0 0
    %479 = vmatpush1.bf16.msra.mxu0 0
    %480 = vmatprep.subr.bf16.mxu0 0
    %481 = vmatpush1.bf16.msra.mxu0 0
    %482 = vmatprep.subr.bf16.mxu0 0
    %483 = vmatpush1.bf16.msra.mxu0 0
    %484 = vmatprep.subr.bf16.mxu0 0
    %485 = vmatpush1.bf16.msra.mxu0 0
    %486 = vmatprep.subr.bf16.mxu0 0
    %487 = vmatpush1.bf16.msra.mxu0 0
    %488 = vmatprep.subr.bf16.mxu0 0
    %489 = vmatpush1.bf16.msra.mxu0 0
    %490 = vmatprep.subr.bf16.mxu0 0
    %491 = vmatpush1.bf16.msra.mxu0 0
    %492 = vmatprep.subr.bf16.mxu0 0
    %493 = vmatpush1.bf16.msra.mxu0 0
    %494 = vmatprep.mubr.bf16.mxu0 0
    %495 = vmatmul.mubr.bf16.gmra.mrb[0].mxu0 %v460
    %v496 = vpop.f32.mrb[0].mxu0
    %v497 = vadd.f32 0.0, %v496
    %v498 = vpop.f32.mrb[0].mxu0
    %v499 = vpop.f32.mrb[0].mxu0
    %v500 = vpop.f32.mrb[0].mxu0
    %501 = vdwg.mxu0
    %v502 = vadd.f32 %v119, %v497
    %v504 = vlaneseq
    %v505 = vshrl.u32 %v504, 7
    %v506 = vsub.s32 0, %v505
    %v507 = vrot.slane %v57, %v506
    %v509 = vadd.f32 %v502, %v507
    %v514 = vunpack.c.l.b16 %v53
    %v515 = vunpack.c.l.b16 %v54
    %v516 = vunpack.c.l.b16 %v55
    %v517 = vunpack.c.l.b16 %v56
    %v518 = vpack.c.b16 %v515, %v514
    %v519 = vpack.c.b16 %v517, %v516
    %522 = vmatprep.subr.bf16.mxu0 0
    %523 = vmatpush1.bf16.msra.mxu0 %v518
    %524 = vmatprep.subr.bf16.mxu0 0
    %525 = vmatpush1.bf16.msra.mxu0 %v519
    %526 = vmatprep.subr.bf16.mxu0 0
    %527 = vmatpush1.bf16.msra.mxu0 0
    %528 = vmatprep.subr.bf16.mxu0 0
    %529 = vmatpush1.bf16.msra.mxu0 0
    %530 = vmatprep.subr.bf16.mxu0 0
    %531 = vmatpush1.bf16.msra.mxu0 0
    %532 = vmatprep.subr.bf16.mxu0 0
    %533 = vmatpush1.bf16.msra.mxu0 0
    %534 = vmatprep.subr.bf16.mxu0 0
    %535 = vmatpush1.bf16.msra.mxu0 0
    %536 = vmatprep.subr.bf16.mxu0 0
    %537 = vmatpush1.bf16.msra.mxu0 0
    %538 = vmatprep.subr.bf16.mxu0 0
    %539 = vmatpush1.bf16.msra.mxu0 0
    %540 = vmatprep.subr.bf16.mxu0 0
    %541 = vmatpush1.bf16.msra.mxu0 0
    %542 = vmatprep.subr.bf16.mxu0 0
    %543 = vmatpush1.bf16.msra.mxu0 0
    %544 = vmatprep.subr.bf16.mxu0 0
    %545 = vmatpush1.bf16.msra.mxu0 0
    %546 = vmatprep.subr.bf16.mxu0 0
    %547 = vmatpush1.bf16.msra.mxu0 0
    %548 = vmatprep.subr.bf16.mxu0 0
    %549 = vmatpush1.bf16.msra.mxu0 0
    %550 = vmatprep.subr.bf16.mxu0 0
    %551 = vmatpush1.bf16.msra.mxu0 0
    %552 = vmatprep.subr.bf16.mxu0 0
    %553 = vmatpush1.bf16.msra.mxu0 0
    %554 = vmatprep.mubr.bf16.mxu0 0
    %555 = vmatmul.mubr.bf16.gmra.mrb[0].mxu0 %v460
    %v556 = vpop.f32.mrb[0].mxu0
    %v557 = vadd.f32 0.0, %v556
    %v558 = vpop.f32.mrb[0].mxu0
    %v559 = vpop.f32.mrb[0].mxu0
    %v560 = vpop.f32.mrb[0].mxu0
    %561 = vdwg.mxu0
    %v562 = vadd.f32 %v443, %v557
    %v564 = vlaneseq
    %v565 = vshrl.u32 %v564, 7
    %v566 = vsub.s32 0, %v565
    %v567 = vrot.slane %v58, %v566
    %v569 = vadd.f32 %v562, %v567
    %v570 = vxor.u32 %v509, 2147483648
    %v571 = vmul.f32 %v570, 1.442695
    %v572 = vpow.pop %v571
    %v573 = vadd.f32 %v572, 1.0
    %v574 = vrcp.pop %v573
    %v575 = vmul.f32 1.0, %v574
    %v576 = vtanh.pop %v509
    %v577 = vmul.f32 %v575, 0.0
    %579 = vrot.lane.b32.xlu0 %v576, 64
    %v580 = vpop.permute.xlu0 %579
    %v582 = vmul.f32 %v575, %v580
    %584 = vrot.lane.b32.xlu0 %v582, 32
    %v585 = vpop.permute.xlu0 %584
    %v587 = vadd.f32 %v577, %v585
    %v588 = vtanh.pop %v587
    %590 = vrot.lane.b32.xlu0 %v588, 64
    %v591 = vpop.permute.xlu0 %590
    %v593 = vmul.f32 %v575, %v591
    %v594 = vxor.u32 %v569, 2147483648
    %v595 = vmul.f32 %v594, 1.442695
    %v596 = vpow.pop %v595
    %v597 = vadd.f32 %v596, 1.0
    %v598 = vrcp.pop %v597
    %v599 = vmul.f32 1.0, %v598
    %v600 = vtanh.pop %v569
    %v601 = vmul.f32 %v599, 0.0
    %603 = vrot.lane.b32.xlu0 %v600, 64
    %v604 = vpop.permute.xlu0 %603
    %v606 = vmul.f32 %v599, %v604
    %608 = vrot.lane.b32.xlu0 %v606, 32
    %v609 = vpop.permute.xlu0 %608
    %v611 = vadd.f32 %v601, %v609
    %v612 = vtanh.pop %v611
    %614 = vrot.lane.b32.xlu0 %v612, 64
    %v615 = vpop.permute.xlu0 %614
    %v617 = vmul.f32 %v599, %v615
    %v618 = vmax.f32 %v593, 0.0
    %v619 = vmax.f32 %v617, 0.0
    %v620 = vpack.c.bf16 %v593, %v593
    %622 = vrot.lane.b32.xlu0 %v620, 32
    %v623 = vpop.permute.xlu0 %622
    %v625 = vsel %vm80, %v623, 0
    %627 = vmatprep.subr.bf16.mxu0 0
    %628 = vmatpush1.bf16.msra.mxu0 %v455
    %629 = vmatprep.subr.bf16.mxu0 0
    %630 = vmatpush1.bf16.msra.mxu0 %v456
    %631 = vmatprep.subr.bf16.mxu0 0
    %632 = vmatpush1.bf16.msra.mxu0 0
    %633 = vmatprep.subr.bf16.mxu0 0
    %634 = vmatpush1.bf16.msra.mxu0 0
    %635 = vmatprep.subr.bf16.mxu0 0
    %636 = vmatpush1.bf16.msra.mxu0 0
    %637 = vmatprep.subr.bf16.mxu0 0
    %638 = vmatpush1.bf16.msra.mxu0 0
    %639 = vmatprep.subr.bf16.mxu0 0
    %640 = vmatpush1.bf16.msra.mxu0 0
    %641 = vmatprep.subr.bf16.mxu0 0
    %642 = vmatpush1.bf16.msra.mxu0 0
    %643 = vmatprep.subr.bf16.mxu0 0
    %644 = vmatpush1.bf16.msra.mxu0 0
    %645 = vmatprep.subr.bf16.mxu0 0
    %646 = vmatpush1.bf16.msra.mxu0 0
    %647 = vmatprep.subr.bf16.mxu0 0
    %648 = vmatpush1.bf16.msra.mxu0 0
    %649 = vmatprep.subr.bf16.mxu0 0
    %650 = vmatpush1.bf16.msra.mxu0 0
    %651 = vmatprep.subr.bf16.mxu0 0
    %652 = vmatpush1.bf16.msra.mxu0 0
    %653 = vmatprep.subr.bf16.mxu0 0
    %654 = vmatpush1.bf16.msra.mxu0 0
    %655 = vmatprep.subr.bf16.mxu0 0
    %656 = vmatpush1.bf16.msra.mxu0 0
    %657 = vmatprep.subr.bf16.mxu0 0
    %658 = vmatpush1.bf16.msra.mxu0 0
    %659 = vmatprep.mubr.bf16.mxu0 0
    %660 = vmatmul.mubr.bf16.gmra.mrb[0].mxu0 %v625
    %v661 = vpop.f32.mrb[0].mxu0
    %v662 = vadd.f32 0.0, %v661
    %v663 = vpop.f32.mrb[0].mxu0
    %v664 = vpop.f32.mrb[0].mxu0
    %v665 = vpop.f32.mrb[0].mxu0
    %666 = vdwg.mxu0
    %v667 = vadd.f32 %v165, %v662
    %v668 = vadd.f32 %v667, %v507
    %v669 = vpack.c.bf16 %v617, %v617
    %671 = vrot.lane.b32.xlu0 %v669, 32
    %v672 = vpop.permute.xlu0 %671
    %v674 = vsel %vm80, %v672, 0
    %676 = vmatprep.subr.bf16.mxu0 0
    %677 = vmatpush1.bf16.msra.mxu0 %v518
    %678 = vmatprep.subr.bf16.mxu0 0
    %679 = vmatpush1.bf16.msra.mxu0 %v519
    %680 = vmatprep.subr.bf16.mxu0 0
    %681 = vmatpush1.bf16.msra.mxu0 0
    %682 = vmatprep.subr.bf16.mxu0 0
    %683 = vmatpush1.bf16.msra.mxu0 0
    %684 = vmatprep.subr.bf16.mxu0 0
    %685 = vmatpush1.bf16.msra.mxu0 0
    %686 = vmatprep.subr.bf16.mxu0 0
    %687 = vmatpush1.bf16.msra.mxu0 0
    %688 = vmatprep.subr.bf16.mxu0 0
    %689 = vmatpush1.bf16.msra.mxu0 0
    %690 = vmatprep.subr.bf16.mxu0 0
    %691 = vmatpush1.bf16.msra.mxu0 0
    %692 = vmatprep.subr.bf16.mxu0 0
    %693 = vmatpush1.bf16.msra.mxu0 0
    %694 = vmatprep.subr.bf16.mxu0 0
    %695 = vmatpush1.bf16.msra.mxu0 0
    %696 = vmatprep.subr.bf16.mxu0 0
    %697 = vmatpush1.bf16.msra.mxu0 0
    %698 = vmatprep.subr.bf16.mxu0 0
    %699 = vmatpush1.bf16.msra.mxu0 0
    %700 = vmatprep.subr.bf16.mxu0 0
    %701 = vmatpush1.bf16.msra.mxu0 0
    %702 = vmatprep.subr.bf16.mxu0 0
    %703 = vmatpush1.bf16.msra.mxu0 0
    %704 = vmatprep.subr.bf16.mxu0 0
    %705 = vmatpush1.bf16.msra.mxu0 0
    %706 = vmatprep.subr.bf16.mxu0 0
    %707 = vmatpush1.bf16.msra.mxu0 0
    %708 = vmatprep.mubr.bf16.mxu0 0
    %709 = vmatmul.mubr.bf16.gmra.mrb[0].mxu0 %v674
    %v710 = vpop.f32.mrb[0].mxu0
    %v711 = vadd.f32 0.0, %v710
    %v712 = vpop.f32.mrb[0].mxu0
    %v713 = vpop.f32.mrb[0].mxu0
    %v714 = vpop.f32.mrb[0].mxu0
    %715 = vdwg.mxu0
    %v716 = vadd.f32 %v397, %v711
    %v717 = vadd.f32 %v716, %v567
    %v718 = vxor.u32 %v668, 2147483648
    %v719 = vmul.f32 %v718, 1.442695
    %v720 = vpow.pop %v719
    %v721 = vadd.f32 %v720, 1.0
    %v722 = vrcp.pop %v721
    %v723 = vmul.f32 1.0, %v722
    %v724 = vtanh.pop %v668
    %v725 = vmul.f32 %v723, %v587
    %727 = vrot.lane.b32.xlu0 %v724, 64
    %v728 = vpop.permute.xlu0 %727
    %v730 = vmul.f32 %v723, %v728
    %732 = vrot.lane.b32.xlu0 %v730, 32
    %v733 = vpop.permute.xlu0 %732
    %v735 = vadd.f32 %v725, %v733
    %v736 = vtanh.pop %v735
    %738 = vrot.lane.b32.xlu0 %v736, 64
    %v739 = vpop.permute.xlu0 %738
    %v741 = vmul.f32 %v723, %v739
    %v742 = vxor.u32 %v717, 2147483648
    %v743 = vmul.f32 %v742, 1.442695
    %v744 = vpow.pop %v743
    %v745 = vadd.f32 %v744, 1.0
    %v746 = vrcp.pop %v745
    %v747 = vmul.f32 1.0, %v746
    %v748 = vtanh.pop %v717
    %v749 = vmul.f32 %v747, %v611
    %751 = vrot.lane.b32.xlu0 %v748, 64
    %v752 = vpop.permute.xlu0 %751
    %v754 = vmul.f32 %v747, %v752
    %756 = vrot.lane.b32.xlu0 %v754, 32
    %v757 = vpop.permute.xlu0 %756
    %v759 = vadd.f32 %v749, %v757
    %v760 = vtanh.pop %v759
    %762 = vrot.lane.b32.xlu0 %v760, 64
    %v763 = vpop.permute.xlu0 %762
    %v765 = vmul.f32 %v747, %v763
    %v766 = vmax.f32 %v618, %v741
    %v767 = vmax.f32 %v619, %v765
    %v768 = vpack.c.bf16 %v741, %v741
    %770 = vrot.lane.b32.xlu0 %v768, 32
    %v771 = vpop.permute.xlu0 %770
    %v773 = vsel %vm80, %v771, 0
    %775 = vmatprep.subr.bf16.mxu0 0
    %776 = vmatpush1.bf16.msra.mxu0 %v455
    %777 = vmatprep.subr.bf16.mxu0 0
    %778 = vmatpush1.bf16.msra.mxu0 %v456
    %779 = vmatprep.subr.bf16.mxu0 0
    %780 = vmatpush1.bf16.msra.mxu0 0
    %781 = vmatprep.subr.bf16.mxu0 0
    %782 = vmatpush1.bf16.msra.mxu0 0
    %783 = vmatprep.subr.bf16.mxu0 0
    %784 = vmatpush1.bf16.msra.mxu0 0
    %785 = vmatprep.subr.bf16.mxu0 0
    %786 = vmatpush1.bf16.msra.mxu0 0
    %787 = vmatprep.subr.bf16.mxu0 0
    %788 = vmatpush1.bf16.msra.mxu0 0
    %789 = vmatprep.subr.bf16.mxu0 0
    %790 = vmatpush1.bf16.msra.mxu0 0
    %791 = vmatprep.subr.bf16.mxu0 0
    %792 = vmatpush1.bf16.msra.mxu0 0
    %793 = vmatprep.subr.bf16.mxu0 0
    %794 = vmatpush1.bf16.msra.mxu0 0
    %795 = vmatprep.subr.bf16.mxu0 0
    %796 = vmatpush1.bf16.msra.mxu0 0
    %797 = vmatprep.subr.bf16.mxu0 0
    %798 = vmatpush1.bf16.msra.mxu0 0
    %799 = vmatprep.subr.bf16.mxu0 0
    %800 = vmatpush1.bf16.msra.mxu0 0
    %801 = vmatprep.subr.bf16.mxu0 0
    %802 = vmatpush1.bf16.msra.mxu0 0
    %803 = vmatprep.subr.bf16.mxu0 0
    %804 = vmatpush1.bf16.msra.mxu0 0
    %805 = vmatprep.subr.bf16.mxu0 0
    %806 = vmatpush1.bf16.msra.mxu0 0
    %807 = vmatprep.mubr.bf16.mxu0 0
    %808 = vmatmul.mubr.bf16.gmra.mrb[0].mxu0 %v773
    %v809 = vpop.f32.mrb[0].mxu0
    %v810 = vadd.f32 0.0, %v809
    %v811 = vpop.f32.mrb[0].mxu0
    %v812 = vpop.f32.mrb[0].mxu0
    %v813 = vpop.f32.mrb[0].mxu0
    %814 = vdwg.mxu0
    %v815 = vadd.f32 %v211, %v810
    %v816 = vadd.f32 %v815, %v507
    %v817 = vpack.c.bf16 %v765, %v765
    %819 = vrot.lane.b32.xlu0 %v817, 32
    %v820 = vpop.permute.xlu0 %819
    %v822 = vsel %vm80, %v820, 0
    %824 = vmatprep.subr.bf16.mxu0 0
    %825 = vmatpush1.bf16.msra.mxu0 %v518
    %826 = vmatprep.subr.bf16.mxu0 0
    %827 = vmatpush1.bf16.msra.mxu0 %v519
    %828 = vmatprep.subr.bf16.mxu0 0
    %829 = vmatpush1.bf16.msra.mxu0 0
    %830 = vmatprep.subr.bf16.mxu0 0
    %831 = vmatpush1.bf16.msra.mxu0 0
    %832 = vmatprep.subr.bf16.mxu0 0
    %833 = vmatpush1.bf16.msra.mxu0 0
    %834 = vmatprep.subr.bf16.mxu0 0
    %835 = vmatpush1.bf16.msra.mxu0 0
    %836 = vmatprep.subr.bf16.mxu0 0
    %837 = vmatpush1.bf16.msra.mxu0 0
    %838 = vmatprep.subr.bf16.mxu0 0
    %839 = vmatpush1.bf16.msra.mxu0 0
    %840 = vmatprep.subr.bf16.mxu0 0
    %841 = vmatpush1.bf16.msra.mxu0 0
    %842 = vmatprep.subr.bf16.mxu0 0
    %843 = vmatpush1.bf16.msra.mxu0 0
    %844 = vmatprep.subr.bf16.mxu0 0
    %845 = vmatpush1.bf16.msra.mxu0 0
    %846 = vmatprep.subr.bf16.mxu0 0
    %847 = vmatpush1.bf16.msra.mxu0 0
    %848 = vmatprep.subr.bf16.mxu0 0
    %849 = vmatpush1.bf16.msra.mxu0 0
    %850 = vmatprep.subr.bf16.mxu0 0
    %851 = vmatpush1.bf16.msra.mxu0 0
    %852 = vmatprep.subr.bf16.mxu0 0
    %853 = vmatpush1.bf16.msra.mxu0 0
    %854 = vmatprep.subr.bf16.mxu0 0
    %855 = vmatpush1.bf16.msra.mxu0 0
    %856 = vmatprep.mubr.bf16.mxu0 0
    %857 = vmatmul.mubr.bf16.gmra.mrb[0].mxu0 %v822
    %v858 = vpop.f32.mrb[0].mxu0
    %v859 = vadd.f32 0.0, %v858
    %v860 = vpop.f32.mrb[0].mxu0
    %v861 = vpop.f32.mrb[0].mxu0
    %v862 = vpop.f32.mrb[0].mxu0
    %863 = vdwg.mxu0
    %v864 = vadd.f32 %v351, %v859
    %v865 = vadd.f32 %v864, %v567
    %v866 = vxor.u32 %v816, 2147483648
    %v867 = vmul.f32 %v866, 1.442695
    %v868 = vpow.pop %v867
    %v869 = vadd.f32 %v868, 1.0
    %v870 = vrcp.pop %v869
    %v871 = vmul.f32 1.0, %v870
    %v872 = vtanh.pop %v816
    %v873 = vmul.f32 %v871, %v735
    %875 = vrot.lane.b32.xlu0 %v872, 64
    %v876 = vpop.permute.xlu0 %875
    %v878 = vmul.f32 %v871, %v876
    %880 = vrot.lane.b32.xlu0 %v878, 32
    %v881 = vpop.permute.xlu0 %880
    %v883 = vadd.f32 %v873, %v881
    %v884 = vtanh.pop %v883
    %886 = vrot.lane.b32.xlu0 %v884, 64
    %v887 = vpop.permute.xlu0 %886
    %v889 = vmul.f32 %v871, %v887
    %v890 = vxor.u32 %v865, 2147483648
    %v891 = vmul.f32 %v890, 1.442695
    %v892 = vpow.pop %v891
    %v893 = vadd.f32 %v892, 1.0
    %v894 = vrcp.pop %v893
    %v895 = vmul.f32 1.0, %v894
    %v896 = vtanh.pop %v865
    %v897 = vmul.f32 %v895, %v759
    %899 = vrot.lane.b32.xlu0 %v896, 64
    %v900 = vpop.permute.xlu0 %899
    %v902 = vmul.f32 %v895, %v900
    %904 = vrot.lane.b32.xlu0 %v902, 32
    %v905 = vpop.permute.xlu0 %904
    %v907 = vadd.f32 %v897, %v905
    %v908 = vtanh.pop %v907
    %910 = vrot.lane.b32.xlu0 %v908, 64
    %v911 = vpop.permute.xlu0 %910
    %v913 = vmul.f32 %v895, %v911
    %v914 = vmax.f32 %v766, %v889
    %v915 = vmax.f32 %v767, %v913
    %v916 = vpack.c.bf16 %v889, %v889
    %918 = vrot.lane.b32.xlu0 %v916, 32
    %v919 = vpop.permute.xlu0 %918
    %v921 = vsel %vm80, %v919, 0
    %923 = vmatprep.subr.bf16.mxu0 0
    %924 = vmatpush1.bf16.msra.mxu0 %v455
    %925 = vmatprep.subr.bf16.mxu0 0
    %926 = vmatpush1.bf16.msra.mxu0 %v456
    %927 = vmatprep.subr.bf16.mxu0 0
    %928 = vmatpush1.bf16.msra.mxu0 0
    %929 = vmatprep.subr.bf16.mxu0 0
    %930 = vmatpush1.bf16.msra.mxu0 0
    %931 = vmatprep.subr.bf16.mxu0 0
    %932 = vmatpush1.bf16.msra.mxu0 0
    %933 = vmatprep.subr.bf16.mxu0 0
    %934 = vmatpush1.bf16.msra.mxu0 0
    %935 = vmatprep.subr.bf16.mxu0 0
    %936 = vmatpush1.bf16.msra.mxu0 0
    %937 = vmatprep.subr.bf16.mxu0 0
    %938 = vmatpush1.bf16.msra.mxu0 0
    %939 = vmatprep.subr.bf16.mxu0 0
    %940 = vmatpush1.bf16.msra.mxu0 0
    %941 = vmatprep.subr.bf16.mxu0 0
    %942 = vmatpush1.bf16.msra.mxu0 0
    %943 = vmatprep.subr.bf16.mxu0 0
    %944 = vmatpush1.bf16.msra.mxu0 0
    %945 = vmatprep.subr.bf16.mxu0 0
    %946 = vmatpush1.bf16.msra.mxu0 0
    %947 = vmatprep.subr.bf16.mxu0 0
    %948 = vmatpush1.bf16.msra.mxu0 0
    %949 = vmatprep.subr.bf16.mxu0 0
    %950 = vmatpush1.bf16.msra.mxu0 0
    %951 = vmatprep.subr.bf16.mxu0 0
    %952 = vmatpush1.bf16.msra.mxu0 0
    %953 = vmatprep.subr.bf16.mxu0 0
    %954 = vmatpush1.bf16.msra.mxu0 0
    %955 = vmatprep.mubr.bf16.mxu0 0
    %956 = vmatmul.mubr.bf16.gmra.mrb[0].mxu0 %v921
    %v957 = vpop.f32.mrb[0].mxu0
    %v958 = vadd.f32 0.0, %v957
    %v959 = vpop.f32.mrb[0].mxu0
    %v960 = vpop.f32.mrb[0].mxu0
    %v961 = vpop.f32.mrb[0].mxu0
    %962 = vdwg.mxu0
    %v963 = vadd.f32 %v257, %v958
    %v964 = vadd.f32 %v963, %v507
    %v965 = vpack.c.bf16 %v913, %v913
    %967 = vrot.lane.b32.xlu0 %v965, 32
    %v968 = vpop.permute.xlu0 %967
    %v970 = vsel %vm80, %v968, 0
    %972 = vmatprep.subr.bf16.mxu0 0
    %973 = vmatpush1.bf16.msra.mxu0 %v518
    %974 = vmatprep.subr.bf16.mxu0 0
    %975 = vmatpush1.bf16.msra.mxu0 %v519
    %976 = vmatprep.subr.bf16.mxu0 0
    %977 = vmatpush1.bf16.msra.mxu0 0
    %978 = vmatprep.subr.bf16.mxu0 0
    %979 = vmatpush1.bf16.msra.mxu0 0
    %980 = vmatprep.subr.bf16.mxu0 0
    %981 = vmatpush1.bf16.msra.mxu0 0
    %982 = vmatprep.subr.bf16.mxu0 0
    %983 = vmatpush1.bf16.msra.mxu0 0
    %984 = vmatprep.subr.bf16.mxu0 0
    %985 = vmatpush1.bf16.msra.mxu0 0
    %986 = vmatprep.subr.bf16.mxu0 0
    %987 = vmatpush1.bf16.msra.mxu0 0
    %988 = vmatprep.subr.bf16.mxu0 0
    %989 = vmatpush1.bf16.msra.mxu0 0
    %990 = vmatprep.subr.bf16.mxu0 0
    %991 = vmatpush1.bf16.msra.mxu0 0
    %992 = vmatprep.subr.bf16.mxu0 0
    %993 = vmatpush1.bf16.msra.mxu0 0
    %994 = vmatprep.subr.bf16.mxu0 0
    %995 = vmatpush1.bf16.msra.mxu0 0
    %996 = vmatprep.subr.bf16.mxu0 0
    %997 = vmatpush1.bf16.msra.mxu0 0
    %998 = vmatprep.subr.bf16.mxu0 0
    %999 = vmatpush1.bf16.msra.mxu0 0
    %1000 = vmatprep.subr.bf16.mxu0 0
    %1001 = vmatpush1.bf16.msra.mxu0 0
    %1002 = vmatprep.subr.bf16.mxu0 0
    %1003 = vmatpush1.bf16.msra.mxu0 0
    %1004 = vmatprep.mubr.bf16.mxu0 0
    %1005 = vmatmul.mubr.bf16.gmra.mrb[0].mxu0 %v970
    %v1006 = vpop.f32.mrb[0].mxu0
    %v1007 = vadd.f32 0.0, %v1006
    %v1008 = vpop.f32.mrb[0].mxu0
    %v1009 = vpop.f32.mrb[0].mxu0
    %v1010 = vpop.f32.mrb[0].mxu0
    %1011 = vdwg.mxu0
    %v1012 = vadd.f32 %v305, %v1007
    %v1013 = vadd.f32 %v1012, %v567
    %v1014 = vxor.u32 %v964, 2147483648
    %v1015 = vmul.f32 %v1014, 1.442695
    %v1016 = vpow.pop %v1015
    %v1017 = vadd.f32 %v1016, 1.0
    %v1018 = vrcp.pop %v1017
    %v1019 = vmul.f32 1.0, %v1018
    %v1020 = vtanh.pop %v964
    %v1021 = vmul.f32 %v1019, %v883
    %1023 = vrot.lane.b32.xlu0 %v1020, 64
    %v1024 = vpop.permute.xlu0 %1023
    %v1026 = vmul.f32 %v1019, %v1024
    %1028 = vrot.lane.b32.xlu0 %v1026, 32
    %v1029 = vpop.permute.xlu0 %1028
    %v1031 = vadd.f32 %v1021, %v1029
    %v1032 = vtanh.pop %v1031
    %1034 = vrot.lane.b32.xlu0 %v1032, 64
    %v1035 = vpop.permute.xlu0 %1034
    %v1037 = vmul.f32 %v1019, %v1035
    %v1038 = vxor.u32 %v1013, 2147483648
    %v1039 = vmul.f32 %v1038, 1.442695
    %v1040 = vpow.pop %v1039
    %v1041 = vadd.f32 %v1040, 1.0
    %v1042 = vrcp.pop %v1041
    %v1043 = vmul.f32 1.0, %v1042
    %v1044 = vtanh.pop %v1013
    %v1045 = vmul.f32 %v1043, %v907
    %1047 = vrot.lane.b32.xlu0 %v1044, 64
    %v1048 = vpop.permute.xlu0 %1047
    %v1050 = vmul.f32 %v1043, %v1048
    %1052 = vrot.lane.b32.xlu0 %v1050, 32
    %v1053 = vpop.permute.xlu0 %1052
    %v1055 = vadd.f32 %v1045, %v1053
    %v1056 = vtanh.pop %v1055
    %1058 = vrot.lane.b32.xlu0 %v1056, 64
    %v1059 = vpop.permute.xlu0 %1058
    %v1061 = vmul.f32 %v1043, %v1059
    %v1062 = vmax.f32 %v914, %v1037
    %v1063 = vmax.f32 %v915, %v1061
    %v1064 = vpack.c.bf16 %v1037, %v1037
    %1066 = vrot.lane.b32.xlu0 %v1064, 32
    %v1067 = vpop.permute.xlu0 %1066
    %v1069 = vsel %vm80, %v1067, 0
    %1071 = vmatprep.subr.bf16.mxu0 0
    %1072 = vmatpush1.bf16.msra.mxu0 %v455
    %1073 = vmatprep.subr.bf16.mxu0 0
    %1074 = vmatpush1.bf16.msra.mxu0 %v456
    %1075 = vmatprep.subr.bf16.mxu0 0
    %1076 = vmatpush1.bf16.msra.mxu0 0
    %1077 = vmatprep.subr.bf16.mxu0 0
    %1078 = vmatpush1.bf16.msra.mxu0 0
    %1079 = vmatprep.subr.bf16.mxu0 0
    %1080 = vmatpush1.bf16.msra.mxu0 0
    %1081 = vmatprep.subr.bf16.mxu0 0
    %1082 = vmatpush1.bf16.msra.mxu0 0
    %1083 = vmatprep.subr.bf16.mxu0 0
    %1084 = vmatpush1.bf16.msra.mxu0 0
    %1085 = vmatprep.subr.bf16.mxu0 0
    %1086 = vmatpush1.bf16.msra.mxu0 0
    %1087 = vmatprep.subr.bf16.mxu0 0
    %1088 = vmatpush1.bf16.msra.mxu0 0
    %1089 = vmatprep.subr.bf16.mxu0 0
    %1090 = vmatpush1.bf16.msra.mxu0 0
    %1091 = vmatprep.subr.bf16.mxu0 0
    %1092 = vmatpush1.bf16.msra.mxu0 0
    %1093 = vmatprep.subr.bf16.mxu0 0
    %1094 = vmatpush1.bf16.msra.mxu0 0
    %1095 = vmatprep.subr.bf16.mxu0 0
    %1096 = vmatpush1.bf16.msra.mxu0 0
    %1097 = vmatprep.subr.bf16.mxu0 0
    %1098 = vmatpush1.bf16.msra.mxu0 0
    %1099 = vmatprep.subr.bf16.mxu0 0
    %1100 = vmatpush1.bf16.msra.mxu0 0
    %1101 = vmatprep.subr.bf16.mxu0 0
    %1102 = vmatpush1.bf16.msra.mxu0 0
    %1103 = vmatprep.mubr.bf16.mxu0 0
    %1104 = vmatmul.mubr.bf16.gmra.mrb[0].mxu0 %v1069
    %v1105 = vpop.f32.mrb[0].mxu0
    %v1106 = vadd.f32 0.0, %v1105
    %v1107 = vpop.f32.mrb[0].mxu0
    %v1108 = vpop.f32.mrb[0].mxu0
    %v1109 = vpop.f32.mrb[0].mxu0
    %1110 = vdwg.mxu0
    %v1111 = vadd.f32 %v303, %v1106
    %v1112 = vadd.f32 %v1111, %v507
    %v1113 = vpack.c.bf16 %v1061, %v1061
    %1115 = vrot.lane.b32.xlu0 %v1113, 32
    %v1116 = vpop.permute.xlu0 %1115
    %v1118 = vsel %vm80, %v1116, 0
    %1120 = vmatprep.subr.bf16.mxu0 0
    %1121 = vmatpush1.bf16.msra.mxu0 %v518
    %1122 = vmatprep.subr.bf16.mxu0 0
    %1123 = vmatpush1.bf16.msra.mxu0 %v519
    %1124 = vmatprep.subr.bf16.mxu0 0
    %1125 = vmatpush1.bf16.msra.mxu0 0
    %1126 = vmatprep.subr.bf16.mxu0 0
    %1127 = vmatpush1.bf16.msra.mxu0 0
    %1128 = vmatprep.subr.bf16.mxu0 0
    %1129 = vmatpush1.bf16.msra.mxu0 0
    %1130 = vmatprep.subr.bf16.mxu0 0
    %1131 = vmatpush1.bf16.msra.mxu0 0
    %1132 = vmatprep.subr.bf16.mxu0 0
    %1133 = vmatpush1.bf16.msra.mxu0 0
    %1134 = vmatprep.subr.bf16.mxu0 0
    %1135 = vmatpush1.bf16.msra.mxu0 0
    %1136 = vmatprep.subr.bf16.mxu0 0
    %1137 = vmatpush1.bf16.msra.mxu0 0
    %1138 = vmatprep.subr.bf16.mxu0 0
    %1139 = vmatpush1.bf16.msra.mxu0 0
    %1140 = vmatprep.subr.bf16.mxu0 0
    %1141 = vmatpush1.bf16.msra.mxu0 0
    %1142 = vmatprep.subr.bf16.mxu0 0
    %1143 = vmatpush1.bf16.msra.mxu0 0
    %1144 = vmatprep.subr.bf16.mxu0 0
    %1145 = vmatpush1.bf16.msra.mxu0 0
    %1146 = vmatprep.subr.bf16.mxu0 0
    %1147 = vmatpush1.bf16.msra.mxu0 0
    %1148 = vmatprep.subr.bf16.mxu0 0
    %1149 = vmatpush1.bf16.msra.mxu0 0
    %1150 = vmatprep.subr.bf16.mxu0 0
    %1151 = vmatpush1.bf16.msra.mxu0 0
    %1152 = vmatprep.mubr.bf16.mxu0 0
    %1153 = vmatmul.mubr.bf16.gmra.mrb[0].mxu0 %v1118
    %v1154 = vpop.f32.mrb[0].mxu0
    %v1155 = vadd.f32 0.0, %v1154
    %v1156 = vpop.f32.mrb[0].mxu0
    %v1157 = vpop.f32.mrb[0].mxu0
    %v1158 = vpop.f32.mrb[0].mxu0
    %1159 = vdwg.mxu0
    %v1160 = vadd.f32 %v259, %v1155
    %v1161 = vadd.f32 %v1160, %v567
    %v1162 = vxor.u32 %v1112, 2147483648
    %v1163 = vmul.f32 %v1162, 1.442695
    %v1164 = vpow.pop %v1163
    %v1165 = vadd.f32 %v1164, 1.0
    %v1166 = vrcp.pop %v1165
    %v1167 = vmul.f32 1.0, %v1166
    %v1168 = vtanh.pop %v1112
    %v1169 = vmul.f32 %v1167, %v1031
    %1171 = vrot.lane.b32.xlu0 %v1168, 64
    %v1172 = vpop.permute.xlu0 %1171
    %v1174 = vmul.f32 %v1167, %v1172
    %1176 = vrot.lane.b32.xlu0 %v1174, 32
    %v1177 = vpop.permute.xlu0 %1176
    %v1179 = vadd.f32 %v1169, %v1177
    %v1180 = vtanh.pop %v1179
    %1182 = vrot.lane.b32.xlu0 %v1180, 64
    %v1183 = vpop.permute.xlu0 %1182
    %v1185 = vmul.f32 %v1167, %v1183
    %v1186 = vxor.u32 %v1161, 2147483648
    %v1187 = vmul.f32 %v1186, 1.442695
    %v1188 = vpow.pop %v1187
    %v1189 = vadd.f32 %v1188, 1.0
    %v1190 = vrcp.pop %v1189
    %v1191 = vmul.f32 1.0, %v1190
    %v1192 = vtanh.pop %v1161
    %v1193 = vmul.f32 %v1191, %v1055
    %1195 = vrot.lane.b32.xlu0 %v1192, 64
    %v1196 = vpop.permute.xlu0 %1195
    %v1198 = vmul.f32 %v1191, %v1196
    %1200 = vrot.lane.b32.xlu0 %v1198, 32
    %v1201 = vpop.permute.xlu0 %1200
    %v1203 = vadd.f32 %v1193, %v1201
    %v1204 = vtanh.pop %v1203
    %1206 = vrot.lane.b32.xlu0 %v1204, 64
    %v1207 = vpop.permute.xlu0 %1206
    %v1209 = vmul.f32 %v1191, %v1207
    %v1210 = vmax.f32 %v1062, %v1185
    %v1211 = vmax.f32 %v1063, %v1209
    %v1212 = vpack.c.bf16 %v1185, %v1185
    %1214 = vrot.lane.b32.xlu0 %v1212, 32
    %v1215 = vpop.permute.xlu0 %1214
    %v1217 = vsel %vm80, %v1215, 0
    %1219 = vmatprep.subr.bf16.mxu0 0
    %1220 = vmatpush1.bf16.msra.mxu0 %v455
    %1221 = vmatprep.subr.bf16.mxu0 0
    %1222 = vmatpush1.bf16.msra.mxu0 %v456
    %1223 = vmatprep.subr.bf16.mxu0 0
    %1224 = vmatpush1.bf16.msra.mxu0 0
    %1225 = vmatprep.subr.bf16.mxu0 0
    %1226 = vmatpush1.bf16.msra.mxu0 0
    %1227 = vmatprep.subr.bf16.mxu0 0
    %1228 = vmatpush1.bf16.msra.mxu0 0
    %1229 = vmatprep.subr.bf16.mxu0 0
    %1230 = vmatpush1.bf16.msra.mxu0 0
    %1231 = vmatprep.subr.bf16.mxu0 0
    %1232 = vmatpush1.bf16.msra.mxu0 0
    %1233 = vmatprep.subr.bf16.mxu0 0
    %1234 = vmatpush1.bf16.msra.mxu0 0
    %1235 = vmatprep.subr.bf16.mxu0 0
    %1236 = vmatpush1.bf16.msra.mxu0 0
    %1237 = vmatprep.subr.bf16.mxu0 0
    %1238 = vmatpush1.bf16.msra.mxu0 0
    %1239 = vmatprep.subr.bf16.mxu0 0
    %1240 = vmatpush1.bf16.msra.mxu0 0
    %1241 = vmatprep.subr.bf16.mxu0 0
    %1242 = vmatpush1.bf16.msra.mxu0 0
    %1243 = vmatprep.subr.bf16.mxu0 0
    %1244 = vmatpush1.bf16.msra.mxu0 0
    %1245 = vmatprep.subr.bf16.mxu0 0
    %1246 = vmatpush1.bf16.msra.mxu0 0
    %1247 = vmatprep.subr.bf16.mxu0 0
    %1248 = vmatpush1.bf16.msra.mxu0 0
    %1249 = vmatprep.subr.bf16.mxu0 0
    %1250 = vmatpush1.bf16.msra.mxu0 0
    %1251 = vmatprep.mubr.bf16.mxu0 0
    %1252 = vmatmul.mubr.bf16.gmra.mrb[0].mxu0 %v1217
    %v1253 = vpop.f32.mrb[0].mxu0
    %v1254 = vadd.f32 0.0, %v1253
    %v1255 = vpop.f32.mrb[0].mxu0
    %v1256 = vpop.f32.mrb[0].mxu0
    %v1257 = vpop.f32.mrb[0].mxu0
    %1258 = vdwg.mxu0
    %v1259 = vadd.f32 %v349, %v1254
    %v1260 = vadd.f32 %v1259, %v507
    %v1261 = vpack.c.bf16 %v1209, %v1209
    %1263 = vrot.lane.b32.xlu0 %v1261, 32
    %v1264 = vpop.permute.xlu0 %1263
    %v1266 = vsel %vm80, %v1264, 0
    %1268 = vmatprep.subr.bf16.mxu0 0
    %1269 = vmatpush1.bf16.msra.mxu0 %v518
    %1270 = vmatprep.subr.bf16.mxu0 0
    %1271 = vmatpush1.bf16.msra.mxu0 %v519
    %1272 = vmatprep.subr.bf16.mxu0 0
    %1273 = vmatpush1.bf16.msra.mxu0 0
    %1274 = vmatprep.subr.bf16.mxu0 0
    %1275 = vmatpush1.bf16.msra.mxu0 0
    %1276 = vmatprep.subr.bf16.mxu0 0
    %1277 = vmatpush1.bf16.msra.mxu0 0
    %1278 = vmatprep.subr.bf16.mxu0 0
    %1279 = vmatpush1.bf16.msra.mxu0 0
    %1280 = vmatprep.subr.bf16.mxu0 0
    %1281 = vmatpush1.bf16.msra.mxu0 0
    %1282 = vmatprep.subr.bf16.mxu0 0
    %1283 = vmatpush1.bf16.msra.mxu0 0
    %1284 = vmatprep.subr.bf16.mxu0 0
    %1285 = vmatpush1.bf16.msra.mxu0 0
    %1286 = vmatprep.subr.bf16.mxu0 0
    %1287 = vmatpush1.bf16.msra.mxu0 0
    %1288 = vmatprep.subr.bf16.mxu0 0
    %1289 = vmatpush1.bf16.msra.mxu0 0
    %1290 = vmatprep.subr.bf16.mxu0 0
    %1291 = vmatpush1.bf16.msra.mxu0 0
    %1292 = vmatprep.subr.bf16.mxu0 0
    %1293 = vmatpush1.bf16.msra.mxu0 0
    %1294 = vmatprep.subr.bf16.mxu0 0
    %1295 = vmatpush1.bf16.msra.mxu0 0
    %1296 = vmatprep.subr.bf16.mxu0 0
    %1297 = vmatpush1.bf16.msra.mxu0 0
    %1298 = vmatprep.subr.bf16.mxu0 0
    %1299 = vmatpush1.bf16.msra.mxu0 0
    %1300 = vmatprep.mubr.bf16.mxu0 0
    %1301 = vmatmul.mubr.bf16.gmra.mrb[0].mxu0 %v1266
    %v1302 = vpop.f32.mrb[0].mxu0
    %v1303 = vadd.f32 0.0, %v1302
    %v1304 = vpop.f32.mrb[0].mxu0
    %v1305 = vpop.f32.mrb[0].mxu0
    %v1306 = vpop.f32.mrb[0].mxu0
    %1307 = vdwg.mxu0
    %v1308 = vadd.f32 %v213, %v1303
    %v1309 = vadd.f32 %v1308, %v567
    %v1310 = vxor.u32 %v1260, 2147483648
    %v1311 = vmul.f32 %v1310, 1.442695
    %v1312 = vpow.pop %v1311
    %v1313 = vadd.f32 %v1312, 1.0
    %v1314 = vrcp.pop %v1313
    %v1315 = vmul.f32 1.0, %v1314
    %v1316 = vtanh.pop %v1260
    %v1317 = vmul.f32 %v1315, %v1179
    %1319 = vrot.lane.b32.xlu0 %v1316, 64
    %v1320 = vpop.permute.xlu0 %1319
    %v1322 = vmul.f32 %v1315, %v1320
    %1324 = vrot.lane.b32.xlu0 %v1322, 32
    %v1325 = vpop.permute.xlu0 %1324
    %v1327 = vadd.f32 %v1317, %v1325
    %v1328 = vtanh.pop %v1327
    %1330 = vrot.lane.b32.xlu0 %v1328, 64
    %v1331 = vpop.permute.xlu0 %1330
    %v1333 = vmul.f32 %v1315, %v1331
    %v1334 = vxor.u32 %v1309, 2147483648
    %v1335 = vmul.f32 %v1334, 1.442695
    %v1336 = vpow.pop %v1335
    %v1337 = vadd.f32 %v1336, 1.0
    %v1338 = vrcp.pop %v1337
    %v1339 = vmul.f32 1.0, %v1338
    %v1340 = vtanh.pop %v1309
    %v1341 = vmul.f32 %v1339, %v1203
    %1343 = vrot.lane.b32.xlu0 %v1340, 64
    %v1344 = vpop.permute.xlu0 %1343
    %v1346 = vmul.f32 %v1339, %v1344
    %1348 = vrot.lane.b32.xlu0 %v1346, 32
    %v1349 = vpop.permute.xlu0 %1348
    %v1351 = vadd.f32 %v1341, %v1349
    %v1352 = vtanh.pop %v1351
    %1354 = vrot.lane.b32.xlu0 %v1352, 64
    %v1355 = vpop.permute.xlu0 %1354
    %v1357 = vmul.f32 %v1339, %v1355
    %v1358 = vmax.f32 %v1210, %v1333
    %v1359 = vmax.f32 %v1211, %v1357
    %v1360 = vpack.c.bf16 %v1333, %v1333
    %1362 = vrot.lane.b32.xlu0 %v1360, 32
    %v1363 = vpop.permute.xlu0 %1362
    %v1365 = vsel %vm80, %v1363, 0
    %1367 = vmatprep.subr.bf16.mxu0 0
    %1368 = vmatpush1.bf16.msra.mxu0 %v455
    %1369 = vmatprep.subr.bf16.mxu0 0
    %1370 = vmatpush1.bf16.msra.mxu0 %v456
    %1371 = vmatprep.subr.bf16.mxu0 0
    %1372 = vmatpush1.bf16.msra.mxu0 0
    %1373 = vmatprep.subr.bf16.mxu0 0
    %1374 = vmatpush1.bf16.msra.mxu0 0
    %1375 = vmatprep.subr.bf16.mxu0 0
    %1376 = vmatpush1.bf16.msra.mxu0 0
    %1377 = vmatprep.subr.bf16.mxu0 0
    %1378 = vmatpush1.bf16.msra.mxu0 0
    %1379 = vmatprep.subr.bf16.mxu0 0
    %1380 = vmatpush1.bf16.msra.mxu0 0
    %1381 = vmatprep.subr.bf16.mxu0 0
    %1382 = vmatpush1.bf16.msra.mxu0 0
    %1383 = vmatprep.subr.bf16.mxu0 0
    %1384 = vmatpush1.bf16.msra.mxu0 0
    %1385 = vmatprep.subr.bf16.mxu0 0
    %1386 = vmatpush1.bf16.msra.mxu0 0
    %1387 = vmatprep.subr.bf16.mxu0 0
    %1388 = vmatpush1.bf16.msra.mxu0 0
    %1389 = vmatprep.subr.bf16.mxu0 0
    %1390 = vmatpush1.bf16.msra.mxu0 0
    %1391 = vmatprep.subr.bf16.mxu0 0
    %1392 = vmatpush1.bf16.msra.mxu0 0
    %1393 = vmatprep.subr.bf16.mxu0 0
    %1394 = vmatpush1.bf16.msra.mxu0 0
    %1395 = vmatprep.subr.bf16.mxu0 0
    %1396 = vmatpush1.bf16.msra.mxu0 0
    %1397 = vmatprep.subr.bf16.mxu0 0
    %1398 = vmatpush1.bf16.msra.mxu0 0
    %1399 = vmatprep.mubr.bf16.mxu0 0
    %1400 = vmatmul.mubr.bf16.gmra.mrb[0].mxu0 %v1365
    %v1401 = vpop.f32.mrb[0].mxu0
    %v1402 = vadd.f32 0.0, %v1401
    %v1403 = vpop.f32.mrb[0].mxu0
    %v1404 = vpop.f32.mrb[0].mxu0
    %v1405 = vpop.f32.mrb[0].mxu0
    %1406 = vdwg.mxu0
    %v1407 = vadd.f32 %v395, %v1402
    %v1408 = vadd.f32 %v1407, %v507
    %v1409 = vpack.c.bf16 %v1357, %v1357
    %1411 = vrot.lane.b32.xlu0 %v1409, 32
    %v1412 = vpop.permute.xlu0 %1411
    %v1414 = vsel %vm80, %v1412, 0
    %1416 = vmatprep.subr.bf16.mxu0 0
    %1417 = vmatpush1.bf16.msra.mxu0 %v518
    %1418 = vmatprep.subr.bf16.mxu0 0
    %1419 = vmatpush1.bf16.msra.mxu0 %v519
    %1420 = vmatprep.subr.bf16.mxu0 0
    %1421 = vmatpush1.bf16.msra.mxu0 0
    %1422 = vmatprep.subr.bf16.mxu0 0
    %1423 = vmatpush1.bf16.msra.mxu0 0
    %1424 = vmatprep.subr.bf16.mxu0 0
    %1425 = vmatpush1.bf16.msra.mxu0 0
    %1426 = vmatprep.subr.bf16.mxu0 0
    %1427 = vmatpush1.bf16.msra.mxu0 0
    %1428 = vmatprep.subr.bf16.mxu0 0
    %1429 = vmatpush1.bf16.msra.mxu0 0
    %1430 = vmatprep.subr.bf16.mxu0 0
    %1431 = vmatpush1.bf16.msra.mxu0 0
    %1432 = vmatprep.subr.bf16.mxu0 0
    %1433 = vmatpush1.bf16.msra.mxu0 0
    %1434 = vmatprep.subr.bf16.mxu0 0
    %1435 = vmatpush1.bf16.msra.mxu0 0
    %1436 = vmatprep.subr.bf16.mxu0 0
    %1437 = vmatpush1.bf16.msra.mxu0 0
    %1438 = vmatprep.subr.bf16.mxu0 0
    %1439 = vmatpush1.bf16.msra.mxu0 0
    %1440 = vmatprep.subr.bf16.mxu0 0
    %1441 = vmatpush1.bf16.msra.mxu0 0
    %1442 = vmatprep.subr.bf16.mxu0 0
    %1443 = vmatpush1.bf16.msra.mxu0 0
    %1444 = vmatprep.subr.bf16.mxu0 0
    %1445 = vmatpush1.bf16.msra.mxu0 0
    %1446 = vmatprep.subr.bf16.mxu0 0
    %1447 = vmatpush1.bf16.msra.mxu0 0
    %1448 = vmatprep.mubr.bf16.mxu0 0
    %1449 = vmatmul.mubr.bf16.gmra.mrb[0].mxu0 %v1414
    %v1450 = vpop.f32.mrb[0].mxu0
    %v1451 = vadd.f32 0.0, %v1450
    %v1452 = vpop.f32.mrb[0].mxu0
    %v1453 = vpop.f32.mrb[0].mxu0
    %v1454 = vpop.f32.mrb[0].mxu0
    %1455 = vdwg.mxu0
    %v1456 = vadd.f32 %v167, %v1451
    %v1457 = vadd.f32 %v1456, %v567
    %v1458 = vxor.u32 %v1408, 2147483648
    %v1459 = vmul.f32 %v1458, 1.442695
    %v1460 = vpow.pop %v1459
    %v1461 = vadd.f32 %v1460, 1.0
    %v1462 = vrcp.pop %v1461
    %v1463 = vmul.f32 1.0, %v1462
    %v1464 = vtanh.pop %v1408
    %v1465 = vmul.f32 %v1463, %v1327
    %1467 = vrot.lane.b32.xlu0 %v1464, 64
    %v1468 = vpop.permute.xlu0 %1467
    %v1470 = vmul.f32 %v1463, %v1468
    %1472 = vrot.lane.b32.xlu0 %v1470, 32
    %v1473 = vpop.permute.xlu0 %1472
    %v1475 = vadd.f32 %v1465, %v1473
    %v1476 = vtanh.pop %v1475
    %1478 = vrot.lane.b32.xlu0 %v1476, 64
    %v1479 = vpop.permute.xlu0 %1478
    %v1481 = vmul.f32 %v1463, %v1479
    %v1482 = vxor.u32 %v1457, 2147483648
    %v1483 = vmul.f32 %v1482, 1.442695
    %v1484 = vpow.pop %v1483
    %v1485 = vadd.f32 %v1484, 1.0
    %v1486 = vrcp.pop %v1485
    %v1487 = vmul.f32 1.0, %v1486
    %v1488 = vtanh.pop %v1457
    %v1489 = vmul.f32 %v1487, %v1351
    %1491 = vrot.lane.b32.xlu0 %v1488, 64
    %v1492 = vpop.permute.xlu0 %1491
    %v1494 = vmul.f32 %v1487, %v1492
    %1496 = vrot.lane.b32.xlu0 %v1494, 32
    %v1497 = vpop.permute.xlu0 %1496
    %v1499 = vadd.f32 %v1489, %v1497
    %v1500 = vtanh.pop %v1499
    %1502 = vrot.lane.b32.xlu0 %v1500, 64
    %v1503 = vpop.permute.xlu0 %1502
    %v1505 = vmul.f32 %v1487, %v1503
    %v1506 = vmax.f32 %v1358, %v1481
    %v1507 = vmax.f32 %v1359, %v1505
    %v1508 = vpack.c.bf16 %v1481, %v1481
    %1510 = vrot.lane.b32.xlu0 %v1508, 32
    %v1511 = vpop.permute.xlu0 %1510
    %v1513 = vsel %vm80, %v1511, 0
    %1515 = vmatprep.subr.bf16.mxu0 0
    %1516 = vmatpush1.bf16.msra.mxu0 %v455
    %1517 = vmatprep.subr.bf16.mxu0 0
    %1518 = vmatpush1.bf16.msra.mxu0 %v456
    %1519 = vmatprep.subr.bf16.mxu0 0
    %1520 = vmatpush1.bf16.msra.mxu0 0
    %1521 = vmatprep.subr.bf16.mxu0 0
    %1522 = vmatpush1.bf16.msra.mxu0 0
    %1523 = vmatprep.subr.bf16.mxu0 0
    %1524 = vmatpush1.bf16.msra.mxu0 0
    %1525 = vmatprep.subr.bf16.mxu0 0
    %1526 = vmatpush1.bf16.msra.mxu0 0
    %1527 = vmatprep.subr.bf16.mxu0 0
    %1528 = vmatpush1.bf16.msra.mxu0 0
    %1529 = vmatprep.subr.bf16.mxu0 0
    %1530 = vmatpush1.bf16.msra.mxu0 0
    %1531 = vmatprep.subr.bf16.mxu0 0
    %1532 = vmatpush1.bf16.msra.mxu0 0
    %1533 = vmatprep.subr.bf16.mxu0 0
    %1534 = vmatpush1.bf16.msra.mxu0 0
    %1535 = vmatprep.subr.bf16.mxu0 0
    %1536 = vmatpush1.bf16.msra.mxu0 0
    %1537 = vmatprep.subr.bf16.mxu0 0
    %1538 = vmatpush1.bf16.msra.mxu0 0
    %1539 = vmatprep.subr.bf16.mxu0 0
    %1540 = vmatpush1.bf16.msra.mxu0 0
    %1541 = vmatprep.subr.bf16.mxu0 0
    %1542 = vmatpush1.bf16.msra.mxu0 0
    %1543 = vmatprep.subr.bf16.mxu0 0
    %1544 = vmatpush1.bf16.msra.mxu0 0
    %1545 = vmatprep.subr.bf16.mxu0 0
    %1546 = vmatpush1.bf16.msra.mxu0 0
    %1547 = vmatprep.mubr.bf16.mxu0 0
    %1548 = vmatmul.mubr.bf16.gmra.mrb[0].mxu0 %v1513
    %v1549 = vpop.f32.mrb[0].mxu0
    %v1550 = vadd.f32 0.0, %v1549
    %v1551 = vpop.f32.mrb[0].mxu0
    %v1552 = vpop.f32.mrb[0].mxu0
    %v1553 = vpop.f32.mrb[0].mxu0
    %1554 = vdwg.mxu0
    %v1555 = vadd.f32 %v441, %v1550
    %v1556 = vadd.f32 %v1555, %v507
    %v1557 = vpack.c.bf16 %v1505, %v1505
    %1559 = vrot.lane.b32.xlu0 %v1557, 32
    %v1560 = vpop.permute.xlu0 %1559
    %v1562 = vsel %vm80, %v1560, 0
    %1564 = vmatprep.subr.bf16.mxu0 0
    %1565 = vmatpush1.bf16.msra.mxu0 %v518
    %1566 = vmatprep.subr.bf16.mxu0 0
    %1567 = vmatpush1.bf16.msra.mxu0 %v519
    %1568 = vmatprep.subr.bf16.mxu0 0
    %1569 = vmatpush1.bf16.msra.mxu0 0
    %1570 = vmatprep.subr.bf16.mxu0 0
    %1571 = vmatpush1.bf16.msra.mxu0 0
    %1572 = vmatprep.subr.bf16.mxu0 0
    %1573 = vmatpush1.bf16.msra.mxu0 0
    %1574 = vmatprep.subr.bf16.mxu0 0
    %1575 = vmatpush1.bf16.msra.mxu0 0
    %1576 = vmatprep.subr.bf16.mxu0 0
    %1577 = vmatpush1.bf16.msra.mxu0 0
    %1578 = vmatprep.subr.bf16.mxu0 0
    %1579 = vmatpush1.bf16.msra.mxu0 0
    %1580 = vmatprep.subr.bf16.mxu0 0
    %1581 = vmatpush1.bf16.msra.mxu0 0
    %1582 = vmatprep.subr.bf16.mxu0 0
    %1583 = vmatpush1.bf16.msra.mxu0 0
    %1584 = vmatprep.subr.bf16.mxu0 0
    %1585 = vmatpush1.bf16.msra.mxu0 0
    %1586 = vmatprep.subr.bf16.mxu0 0
    %1587 = vmatpush1.bf16.msra.mxu0 0
    %1588 = vmatprep.subr.bf16.mxu0 0
    %1589 = vmatpush1.bf16.msra.mxu0 0
    %1590 = vmatprep.subr.bf16.mxu0 0
    %1591 = vmatpush1.bf16.msra.mxu0 0
    %1592 = vmatprep.subr.bf16.mxu0 0
    %1593 = vmatpush1.bf16.msra.mxu0 0
    %1594 = vmatprep.subr.bf16.mxu0 0
    %1595 = vmatpush1.bf16.msra.mxu0 0
    %1596 = vmatprep.mubr.bf16.mxu0 0
    %1597 = vmatmul.mubr.bf16.gmra.mrb[0].mxu0 %v1562
    %v1598 = vpop.f32.mrb[0].mxu0
    %v1599 = vadd.f32 0.0, %v1598
    %v1600 = vpop.f32.mrb[0].mxu0
    %v1601 = vpop.f32.mrb[0].mxu0
    %v1602 = vpop.f32.mrb[0].mxu0
    %1603 = vdwg.mxu0
    %v1604 = vadd.f32 %v121, %v1599
    %v1605 = vadd.f32 %v1604, %v567
    %v1606 = vxor.u32 %v1556, 2147483648
    %v1607 = vmul.f32 %v1606, 1.442695
    %v1608 = vpow.pop %v1607
    %v1609 = vadd.f32 %v1608, 1.0
    %v1610 = vrcp.pop %v1609
    %v1611 = vmul.f32 1.0, %v1610
    %v1612 = vtanh.pop %v1556
    %v1613 = vmul.f32 %v1611, %v1475
    %1615 = vrot.lane.b32.xlu0 %v1612, 64
    %v1616 = vpop.permute.xlu0 %1615
    %v1618 = vmul.f32 %v1611, %v1616
    %1620 = vrot.lane.b32.xlu0 %v1618, 32
    %v1621 = vpop.permute.xlu0 %1620
    %v1623 = vadd.f32 %v1613, %v1621
    %v1624 = vtanh.pop %v1623
    %1626 = vrot.lane.b32.xlu0 %v1624, 64
    %v1627 = vpop.permute.xlu0 %1626
    %v1629 = vmul.f32 %v1611, %v1627
    %v1630 = vxor.u32 %v1605, 2147483648
    %v1631 = vmul.f32 %v1630, 1.442695
    %v1632 = vpow.pop %v1631
    %v1633 = vadd.f32 %v1632, 1.0
    %v1634 = vrcp.pop %v1633
    %v1635 = vmul.f32 1.0, %v1634
    %v1636 = vtanh.pop %v1605
    %v1637 = vmul.f32 %v1635, %v1499
    %1639 = vrot.lane.b32.xlu0 %v1636, 64
    %v1640 = vpop.permute.xlu0 %1639
    %v1642 = vmul.f32 %v1635, %v1640
    %1644 = vrot.lane.b32.xlu0 %v1642, 32
    %v1645 = vpop.permute.xlu0 %1644
    %v1647 = vadd.f32 %v1637, %v1645
    %v1648 = vtanh.pop %v1647
    %1650 = vrot.lane.b32.xlu0 %v1648, 64
    %v1651 = vpop.permute.xlu0 %1650
    %v1653 = vmul.f32 %v1635, %v1651
    %v1654 = vmax.f32 %v1506, %v1629
    %v1655 = vmax.f32 %v1507, %v1653
    %v1656 = vld [vmem:[#allocation2] sm:$0x1]
    %v1657 = vld [vmem:[#allocation2 + $0x1] sm:$0x1]
    %v1658 = vld [vmem:[#allocation2 + $0x2] sm:$0x1]
    %v1659 = vld [vmem:[#allocation2 + $0x3] sm:$0x1]
    %v1660 = vld [vmem:[#allocation2 + $0x4] sm:$0x1]
    %v1661 = vld [vmem:[#allocation2 + $0x5] sm:$0x1]
    %v1662 = vld [vmem:[#allocation2 + $0x6] sm:$0x1]
    %v1663 = vld [vmem:[#allocation2 + $0x7] sm:$0x1]
    %v1664 = vunpack.c.l.bf16 %v1656
    %v1665 = vunpack.c.l.bf16 %v1657
    %v1666 = vunpack.c.l.bf16 %v1658
    %v1667 = vunpack.c.l.bf16 %v1659
    %v1668 = vunpack.c.l.bf16 %v1660
    %v1669 = vunpack.c.l.bf16 %v1661
    %v1670 = vunpack.c.l.bf16 %v1662
    %v1671 = vunpack.c.l.bf16 %v1663
    %v1672 = vmax.f32 %v1664, 0.0
    %v1673 = vmax.f32 %v1665, 0.0
    %v1674 = vmax.f32 %v1666, 0.0
    %v1675 = vmax.f32 %v1667, 0.0
    %v1676 = vmax.f32 %v1668, 0.0
    %v1677 = vmax.f32 %v1669, 0.0
    %v1678 = vmax.f32 %v1670, 0.0
    %v1679 = vmax.f32 %v1671, 0.0
    %vm1680 = vcmask 254976
    %v1681 = vsel %vm1680, %v1672, -inf
    %v1682 = vsel %vm1680, %v1673, -inf
    %v1683 = vsel %vm1680, %v1674, -inf
    %v1684 = vsel %vm1680, %v1675, -inf
    %v1685 = vsel %vm1680, %v1676, -inf
    %v1686 = vmax.f32 %v1681, %v1685
    %v1687 = vsel %vm1680, %v1677, -inf
    %v1688 = vmax.f32 %v1682, %v1687
    %v1689 = vsel %vm1680, %v1678, -inf
    %v1690 = vmax.f32 %v1683, %v1689
    %v1691 = vsel %vm1680, %v1679, -inf
    %v1692 = vmax.f32 %v1684, %v1691
    %v1693 = vmax.f32 %v1686, %v1688
    %v1694 = vmax.f32 %v1690, %v1692
    %v1695 = vmax.f32 %v1693, %v1694
    %v1696 = vld [vmem:[%s6] sm:$0xf]
    %v1697 = vld [vmem:[%s6 + $0x4] sm:$0xf]
    %v1698 = vld [vmem:[%s6 + $0x8] sm:$0xf]
    %v1699 = vld [vmem:[%s6 + $0xc] sm:$0xf]
    %v1700 = vld [vmem:[%s6 + $0x10] sm:$0xf]
    %v1701 = vld [vmem:[%s6 + $0x14] sm:$0xf]
    %v1702 = vld [vmem:[%s6 + $0x18] sm:$0xf]
    %v1703 = vld [vmem:[%s6 + $0x1c] sm:$0xf]
    %v1704 = vld [vmem:[%s6 + $0x20] sm:$0xf]
    %v1705 = vld [vmem:[%s6 + $0x24] sm:$0xf]
    %v1706 = vld [vmem:[%s6 + $0x28] sm:$0xf]
    %v1707 = vld [vmem:[%s6 + $0x2c] sm:$0xf]
    %v1708 = vpack.c.bf16 %v1695, %v1695
    %v1709 = vpack.c.bf16 %v1654, %v1654
    %1711 = vrot.lane.b32.xlu0 %v1709, 32
    %v1712 = vpop.permute.xlu0 %1711
    %v1717 = vunpack.c.l.b16 %v1700
    %v1718 = vunpack.c.l.b16 %v1701
    %v1719 = vunpack.c.l.b16 %v1702
    %v1720 = vunpack.c.l.b16 %v1703
    %v1721 = vpack.c.b16 %v1718, %v1717
    %v1722 = vpack.c.b16 %v1720, %v1719
    %v1726 = vsel %vm80, %v1712, 0
    %1728 = vmatprep.subr.bf16.mxu0 0
    %1729 = vmatpush1.bf16.msra.mxu0 %v1721
    %1730 = vmatprep.subr.bf16.mxu0 0
    %1731 = vmatpush1.bf16.msra.mxu0 %v1722
    %1732 = vmatprep.subr.bf16.mxu0 0
    %1733 = vmatpush1.bf16.msra.mxu0 0
    %1734 = vmatprep.subr.bf16.mxu0 0
    %1735 = vmatpush1.bf16.msra.mxu0 0
    %1736 = vmatprep.subr.bf16.mxu0 0
    %1737 = vmatpush1.bf16.msra.mxu0 0
    %1738 = vmatprep.subr.bf16.mxu0 0
    %1739 = vmatpush1.bf16.msra.mxu0 0
    %1740 = vmatprep.subr.bf16.mxu0 0
    %1741 = vmatpush1.bf16.msra.mxu0 0
    %1742 = vmatprep.subr.bf16.mxu0 0
    %1743 = vmatpush1.bf16.msra.mxu0 0
    %1744 = vmatprep.subr.bf16.mxu0 0
    %1745 = vmatpush1.bf16.msra.mxu0 0
    %1746 = vmatprep.subr.bf16.mxu0 0
    %1747 = vmatpush1.bf16.msra.mxu0 0
    %1748 = vmatprep.subr.bf16.mxu0 0
    %1749 = vmatpush1.bf16.msra.mxu0 0
    %1750 = vmatprep.subr.bf16.mxu0 0
    %1751 = vmatpush1.bf16.msra.mxu0 0
    %1752 = vmatprep.subr.bf16.mxu0 0
    %1753 = vmatpush1.bf16.msra.mxu0 0
    %1754 = vmatprep.subr.bf16.mxu0 0
    %1755 = vmatpush1.bf16.msra.mxu0 0
    %1756 = vmatprep.subr.bf16.mxu0 0
    %1757 = vmatpush1.bf16.msra.mxu0 0
    %1758 = vmatprep.subr.bf16.mxu0 0
    %1759 = vmatpush1.bf16.msra.mxu0 0
    %1760 = vmatprep.mubr.bf16.mxu0 0
    %1761 = vmatmul.mubr.bf16.gmra.mrb[0].mxu0 %v1726
    %v1762 = vpop.f32.mrb[0].mxu0
    %v1763 = vadd.f32 0.0, %v1762
    %v1764 = vpop.f32.mrb[0].mxu0
    %v1765 = vpop.f32.mrb[0].mxu0
    %v1766 = vpop.f32.mrb[0].mxu0
    %1767 = vdwg.mxu0
    %v1772 = vunpack.c.l.b16 %v1696
    %v1773 = vunpack.c.l.b16 %v1697
    %v1774 = vunpack.c.l.b16 %v1698
    %v1775 = vunpack.c.l.b16 %v1699
    %v1776 = vpack.c.b16 %v1773, %v1772
    %v1777 = vpack.c.b16 %v1775, %v1774
    %v1781 = vsel %vm80, %v1708, 0
    %1783 = vmatprep.subr.bf16.mxu0 0
    %1784 = vmatpush1.bf16.msra.mxu0 %v1776
    %1785 = vmatprep.subr.bf16.mxu0 0
    %1786 = vmatpush1.bf16.msra.mxu0 %v1777
    %1787 = vmatprep.subr.bf16.mxu0 0
    %1788 = vmatpush1.bf16.msra.mxu0 0
    %1789 = vmatprep.subr.bf16.mxu0 0
    %1790 = vmatpush1.bf16.msra.mxu0 0
    %1791 = vmatprep.subr.bf16.mxu0 0
    %1792 = vmatpush1.bf16.msra.mxu0 0
    %1793 = vmatprep.subr.bf16.mxu0 0
    %1794 = vmatpush1.bf16.msra.mxu0 0
    %1795 = vmatprep.subr.bf16.mxu0 0
    %1796 = vmatpush1.bf16.msra.mxu0 0
    %1797 = vmatprep.subr.bf16.mxu0 0
    %1798 = vmatpush1.bf16.msra.mxu0 0
    %1799 = vmatprep.subr.bf16.mxu0 0
    %1800 = vmatpush1.bf16.msra.mxu0 0
    %1801 = vmatprep.subr.bf16.mxu0 0
    %1802 = vmatpush1.bf16.msra.mxu0 0
    %1803 = vmatprep.subr.bf16.mxu0 0
    %1804 = vmatpush1.bf16.msra.mxu0 0
    %1805 = vmatprep.subr.bf16.mxu0 0
    %1806 = vmatpush1.bf16.msra.mxu0 0
    %1807 = vmatprep.subr.bf16.mxu0 0
    %1808 = vmatpush1.bf16.msra.mxu0 0
    %1809 = vmatprep.subr.bf16.mxu0 0
    %1810 = vmatpush1.bf16.msra.mxu0 0
    %1811 = vmatprep.subr.bf16.mxu0 0
    %1812 = vmatpush1.bf16.msra.mxu0 0
    %1813 = vmatprep.subr.bf16.mxu0 0
    %1814 = vmatpush1.bf16.msra.mxu0 0
    %1815 = vmatprep.mubr.bf16.mxu0 0
    %1816 = vmatmul.mubr.bf16.gmra.mrb[0].mxu0 %v1781
    %v1817 = vpop.f32.mrb[0].mxu0
    %v1818 = vadd.f32 %v1763, %v1817
    %v1819 = vpop.f32.mrb[0].mxu0
    %v1820 = vpop.f32.mrb[0].mxu0
    %v1821 = vpop.f32.mrb[0].mxu0
    %1822 = vdwg.mxu0
    %v1823 = vpack.c.bf16 %v1655, %v1655
    %1825 = vrot.lane.b32.xlu0 %v1823, 32
    %v1826 = vpop.permute.xlu0 %1825
    %v1831 = vunpack.c.l.b16 %v1704
    %v1832 = vunpack.c.l.b16 %v1705
    %v1833 = vunpack.c.l.b16 %v1706
    %v1834 = vunpack.c.l.b16 %v1707
    %v1835 = vpack.c.b16 %v1832, %v1831
    %v1836 = vpack.c.b16 %v1834, %v1833
    %v1840 = vsel %vm80, %v1826, 0
    %1842 = vmatprep.subr.bf16.mxu0 0
    %1843 = vmatpush1.bf16.msra.mxu0 %v1835
    %1844 = vmatprep.subr.bf16.mxu0 0
    %1845 = vmatpush1.bf16.msra.mxu0 %v1836
    %1846 = vmatprep.subr.bf16.mxu0 0
    %1847 = vmatpush1.bf16.msra.mxu0 0
    %1848 = vmatprep.subr.bf16.mxu0 0
    %1849 = vmatpush1.bf16.msra.mxu0 0
    %1850 = vmatprep.subr.bf16.mxu0 0
    %1851 = vmatpush1.bf16.msra.mxu0 0
    %1852 = vmatprep.subr.bf16.mxu0 0
    %1853 = vmatpush1.bf16.msra.mxu0 0
    %1854 = vmatprep.subr.bf16.mxu0 0
    %1855 = vmatpush1.bf16.msra.mxu0 0
    %1856 = vmatprep.subr.bf16.mxu0 0
    %1857 = vmatpush1.bf16.msra.mxu0 0
    %1858 = vmatprep.subr.bf16.mxu0 0
    %1859 = vmatpush1.bf16.msra.mxu0 0
    %1860 = vmatprep.subr.bf16.mxu0 0
    %1861 = vmatpush1.bf16.msra.mxu0 0
    %1862 = vmatprep.subr.bf16.mxu0 0
    %1863 = vmatpush1.bf16.msra.mxu0 0
    %1864 = vmatprep.subr.bf16.mxu0 0
    %1865 = vmatpush1.bf16.msra.mxu0 0
    %1866 = vmatprep.subr.bf16.mxu0 0
    %1867 = vmatpush1.bf16.msra.mxu0 0
    %1868 = vmatprep.subr.bf16.mxu0 0
    %1869 = vmatpush1.bf16.msra.mxu0 0
    %1870 = vmatprep.subr.bf16.mxu0 0
    %1871 = vmatpush1.bf16.msra.mxu0 0
    %1872 = vmatprep.subr.bf16.mxu0 0
    %1873 = vmatpush1.bf16.msra.mxu0 0
    %1874 = vmatprep.mubr.bf16.mxu0 0
    %1875 = vmatmul.mubr.bf16.gmra.mrb[0].mxu0 %v1840
    %v1876 = vpop.f32.mrb[0].mxu0
    %v1877 = vadd.f32 0.0, %v1876
    %v1878 = vpop.f32.mrb[0].mxu0
    %v1879 = vpop.f32.mrb[0].mxu0
    %v1880 = vpop.f32.mrb[0].mxu0
    %1881 = vdwg.mxu0
    %v1882 = vadd.f32 %v1818, %v1877
    %v1883 = vld [vmem:[%s7] sm:$0x1]
    %v1885 = vlaneseq
    %v1886 = vshrl.u32 %v1885, 7
    %v1887 = vsub.s32 0, %v1886
    %v1888 = vrot.slane %v1883, %v1887
    %v1890 = vadd.f32 %v1882, %v1888
    %vm1891 = vcmask 25600
    %1892 = vst.msk [vmem:[#allocation5] sm:$0x3] %vm1891, %v1890
    // Predicated region
    $region38: #{tpu_custom_call.1} parent=1 // pred_check
      _
    $region39: #{tpu_custom_call.1} parent=1 // pred_check_branch
      %1894 = sbr.rel (0) target = $region41
    $region40: #{tpu_custom_call.1} parent=1 // pred_region
      %s1896 = ssub.s32 32, 32
      %1897 = vsyncadd [#allocation4], %s1896
      %s1899 = sshll.u32 [#allocation5], 4
      %s1900 = int_to_ptr.vmem [resolvable:$true] %s1899
      %1902 = dma.vmem_to_hbm [thread:$0]  %s1900, 32, %s8, [#allocation4]
    $region41: #{tpu_custom_call.1} parent=1 // pred_fallthru
      _
    // Predicated region
    $region42: #{tpu_custom_call.1} parent=1 // pred_check
      _
    $region43: #{tpu_custom_call.1} parent=1 // pred_check_branch
      %1904 = sbr.rel (0) target = $region45
    $region44: #{tpu_custom_call.1} parent=1 // pred_region
      %1905 = dma.done [#allocation4], 32
    $region45: #{tpu_custom_call.1} parent=1 // pred_fallthru
      _
    %1906 = vsyncpa [#allocation3], 1
    %1907 = vsyncpa [#allocation4], 1

</llo_original>
